<compile_context>
chip_gen: v7x
topology: tpu7x:2x2x1
jax: 0.10.0
libtpu: 0.0.40
codegen_flags: <defaults>
</compile_context>

<pallas_src>
import jax
import jax.numpy as jnp
from jax import lax
from jax.experimental import pallas as pl
from jax.experimental.pallas import tpu as pltpu

INPUT_SIZE = 784
NUM_CLASSES = 10


def _linear_kernel(x_ref, wt_ref, b_ref, o_ref):
    # x_ref: (TILE_B, 784), wt_ref: (784, 10), b_ref: (1, 10), o_ref: (TILE_B, 10)
    acc = jnp.dot(
        x_ref[...], wt_ref[...],
        preferred_element_type=jnp.float32,
        precision=lax.Precision.HIGHEST)          # true f32 accumulation; free (mem-bound)
    o_ref[...] = (acc + b_ref[...]).astype(o_ref.dtype)


def _round_up8(n):
    return max(8, ((n + 7) // 8) * 8)


def _auto_tile_b(batch_rows):
    """Biggest batch tile that comfortably fits this generation's VMEM."""
    try:
        vmem_phys = pltpu.get_tpu_info().vmem_capacity_bytes
    except Exception:
        vmem_phys = 64 << 20                       # conservative: assume smallest (v7x)
    # 128-MiB chips (v5e / v6e): 8192 rows; 64-MiB chips (v7x): 4096 rows.
    tb = 8192 if vmem_phys >= (100 << 20) else 4096
    return min(tb, _round_up8(batch_rows))


def _vmem_limit_bytes(tb, x_itemsize):
    x_bytes = 2 * tb * INPUT_SIZE * x_itemsize          # double-buffered input stream
    out_bytes = 2 * tb * 128 * 4                         # output (lane-padded), double-buffered
    wb_bytes = 2 * (INPUT_SIZE * 128 * 4 + 128 * 4)      # weight + bias (lane-padded), generous
    limit = x_bytes + out_bytes + wb_bytes + (8 << 20)   # headroom for internal scratch
    return max(limit, 32 << 20)


def single_layer_perceptron(x, weight, bias, *, tile_b=None, x_dtype=jnp.float32):
    """Forward pass of SingleLayerPerceptron.

    Args:
      x:      any shape with total elements B*784 (flattened to (B, 784), like x.view(-1, 784)).
      weight: (NUM_CLASSES, INPUT_SIZE)  -- torch nn.Linear convention.
      bias:   (NUM_CLASSES,)
      tile_b: batch tile size; None -> auto-picked per TPU generation.
      x_dtype: dtype for the x/weight HBM stream (jnp.bfloat16 halves traffic; default
               f32 preserves exact module semantics).
    Returns:
      (B, NUM_CLASSES) float32 logits.
    """
    x2d = x.reshape(-1, INPUT_SIZE).astype(x_dtype)
    B = x2d.shape[0]
    w_t = weight.astype(x_dtype).T                       # (784, 10): one-time 31 KB transpose
    b2d = bias.reshape(1, NUM_CLASSES).astype(jnp.float32)

    if tile_b is None:
        tb = _auto_tile_b(B)
    else:
        tb = min(max(8, (tile_b // 8) * 8), _round_up8(B))
    grid = (pl.cdiv(B, tb),)

    itemsize = jnp.dtype(x_dtype).itemsize
    cost = pl.CostEstimate(
        flops=2 * B * INPUT_SIZE * NUM_CLASSES,
        bytes_accessed=(B * INPUT_SIZE * itemsize
                        + NUM_CLASSES * INPUT_SIZE * itemsize
                        + NUM_CLASSES * 4
                        + B * NUM_CLASSES * 4),
        transcendentals=0,
    )

    out = pl.pallas_call(
        _linear_kernel,
        out_shape=jax.ShapeDtypeStruct((B, NUM_CLASSES), jnp.float32),
        grid=grid,
        in_specs=[
            pl.BlockSpec((tb, INPUT_SIZE), lambda i: (i, 0)),              # x tile (streamed)
            pl.BlockSpec((INPUT_SIZE, NUM_CLASSES), lambda i: (0, 0)),     # weight.T (resident)
            pl.BlockSpec((1, NUM_CLASSES), lambda i: (0, 0)),              # bias (resident)
        ],
        out_specs=pl.BlockSpec((tb, NUM_CLASSES), lambda i: (i, 0)),
        compiler_params=pltpu.CompilerParams(
            dimension_semantics=("parallel",),
            vmem_limit_bytes=int(_vmem_limit_bytes(tb, itemsize)),
        ),
        cost_estimate=cost,
    )(x2d, w_t, b2d)
    return out


def init_params(key):
    # torch.nn.Linear default init: U(-1/sqrt(in_features), 1/sqrt(in_features)).
    kw, kb = jax.random.split(key)
    bound = 1.0 / (INPUT_SIZE ** 0.5)
    weight = jax.random.uniform(
        kw, (NUM_CLASSES, INPUT_SIZE), jnp.float32, minval=-bound, maxval=bound)
    bias = jax.random.uniform(
        kb, (NUM_CLASSES,), jnp.float32, minval=-bound, maxval=bound)
    return weight, bias


if __name__ == "__main__":
    key = jax.random.PRNGKey(0)
    k_x, k_x2, k_p = jax.random.split(key, 3)
    weight, bias = init_params(k_p)

    # Test 1: small MNIST-like batch (2, 1, 28, 28) -> view(-1, 784); auto tile.
    x = jax.random.normal(k_x, (2, 1, 28, 28), jnp.float32)
    out = jax.block_until_ready(single_layer_perceptron(x, weight, bias))
    ref = x.reshape(-1, INPUT_SIZE) @ weight.T + bias
    assert out.shape == (2, NUM_CLASSES)
    assert jnp.allclose(out, ref, atol=2e-5, rtol=2e-5), float(jnp.max(jnp.abs(out - ref)))

    # Test 2: multi-step grid with a partial final tile (B=300, tile_b=128).
    x_big = jax.random.normal(k_x2, (300, INPUT_SIZE), jnp.float32)
    out_big = jax.block_until_ready(
        single_layer_perceptron(x_big, weight, bias, tile_b=128))
    ref_big = x_big @ weight.T + bias
    assert out_big.shape == (300, NUM_CLASSES)
    assert jnp.allclose(out_big, ref_big, atol=2e-5, rtol=2e-5), \
        float(jnp.max(jnp.abs(out_big - ref_big)))

    print("KERNEL_OK")
</pallas_src>

<mosaic_0001>
module attributes {stable_mosaic.version = 11 : i64} {
  func.func @_linear_kernel(%arg0: i32, %arg1: memref<8x784xf32, #tpu.memory_space<vmem>>, %arg2: memref<784x10xf32, #tpu.memory_space<vmem>>, %arg3: memref<1x10xf32, #tpu.memory_space<vmem>>, %arg4: memref<8x10xf32, #tpu.memory_space<vmem>>) attributes {dimension_semantics = [#tpu.dimension_semantics<parallel>], iteration_bounds = array<i64: 1>, scalar_prefetch = 0 : i64, scratch_operands = 0 : i64, tpu.core_type = #tpu.core_type<tc>, window_params = [{transform_indices = @transform_0, window_bounds = array<i64: 8, 784>}, {pipeline_mode = #tpu.pipeline_mode<synchronous>, transform_indices = @transform_1, window_bounds = array<i64: 784, 10>}, {pipeline_mode = #tpu.pipeline_mode<synchronous>, transform_indices = @transform_2, window_bounds = array<i64: 1, 10>}, {transform_indices = @transform_3, window_bounds = array<i64: 8, 10>}]} {
    %c0 = arith.constant 0 : index
    %c0_0 = arith.constant 0 : index
    %0 = vector.load %arg1[%c0, %c0_0] : memref<8x784xf32, #tpu.memory_space<vmem>>, vector<8x784xf32>
    %c0_1 = arith.constant 0 : index
    %c0_2 = arith.constant 0 : index
    %1 = vector.load %arg2[%c0_1, %c0_2] : memref<784x10xf32, #tpu.memory_space<vmem>>, vector<784x10xf32>
    %cst = arith.constant dense<0.000000e+00> : vector<8x10xf32>
    %2 = tpu.matmul %0, %1, %cst {dimension_numbers = #tpu.dot_dimension_numbers<[1], [0], [0], [1], [0, 0, 1, 1], [], []>, precision = #tpu.contract_precision<fp32>} : vector<8x784xf32>, vector<784x10xf32>, vector<8x10xf32> -> vector<8x10xf32>
    %c0_3 = arith.constant 0 : index
    %c0_4 = arith.constant 0 : index
    %3 = vector.load %arg3[%c0_3, %c0_4] : memref<1x10xf32, #tpu.memory_space<vmem>>, vector<1x10xf32>
    %4 = vector.broadcast %3 : vector<1x10xf32> to vector<8x10xf32>
    %5 = arith.addf %2, %4 : vector<8x10xf32>
    %c0_5 = arith.constant 0 : index
    %c0_6 = arith.constant 0 : index
    %6 = vector.load %arg4[%c0_5, %c0_6] : memref<8x10xf32, #tpu.memory_space<vmem>>, vector<8x10xf32>
    tpu.vector_store %arg4[%c0_5, %c0_6], %5 {strides = array<i32>} : memref<8x10xf32, #tpu.memory_space<vmem>>, vector<8x10xf32>,
    return
  }
  func.func @transform_0(%arg0: i32) -> (i32, i32) {
    %c0_i32 = arith.constant 0 : i32
    %c0_i32_0 = arith.constant 0 : i32
    return %arg0, %c0_i32 : i32, i32
  }
  func.func @transform_1(%arg0: i32) -> (i32, i32) {
    %c0_i32 = arith.constant 0 : i32
    %c0_i32_0 = arith.constant 0 : i32
    %c0_i32_1 = arith.constant 0 : i32
    return %c0_i32, %c0_i32_0 : i32, i32
  }
  func.func @transform_2(%arg0: i32) -> (i32, i32) {
    %c0_i32 = arith.constant 0 : i32
    %c0_i32_0 = arith.constant 0 : i32
    %c0_i32_1 = arith.constant 0 : i32
    return %c0_i32, %c0_i32_0 : i32, i32
  }
  func.func @transform_3(%arg0: i32) -> (i32, i32) {
    %c0_i32 = arith.constant 0 : i32
    %c0_i32_0 = arith.constant 0 : i32
    return %arg0, %c0_i32 : i32, i32
  }
}

</mosaic_0001>

<llo_original>
// kernel: tpu_custom_call.1
$region0: #{tpu_custom_call.1}
  #allocation0 [shape = 'u32[]', space=smem, size = 0x4, offset = 0x4, fixed_abs, tag = 'smem constant byte address 0x4 - core index']
  #allocation1 [shape = 'u32[144,128]{1,0:T(1,128)}', space=vmem, size = 0x12000, scoped, tag = 'internal scratch']
  %s0 = inlined_call_operand.vmem [shape: f32[2,784], index: 0, kind: input, shape index: {}]
  %s1 = inlined_call_operand.vmem [shape: f32[784,10], index: 1, kind: input, shape index: {}]
  %s2 = inlined_call_operand.vmem [shape: f32[1,10], index: 2, kind: input, shape index: {}]
  %s3 = inlined_call_operand.hbm [shape: f32[2,10], index: 3, kind: output, shape index: {}]
  %s4 = sld [smem:[#allocation0]]
  $region22: #{tpu_custom_call.1} parent=0
    _
  %s6 = ssub.s32 1, %s4
  %s7 = scalar_select 0, %s6, %s4
  $region1: #{tpu_custom_call.1} parent=0
    #allocation2 [shape = 'u8[4096]{0}', space=vmem, size = 0x1000, scoped, tag = 'output window, operand 0, single buffered']
    #allocation3 [shape = 's32[1]{0}', space=sflag, size = 0x4, scoped, tag = 'scoped memory for tpu_custom_call.1']
    %8 = vsyncpa [#allocation3], 0
    // Predicated region
    $region2: #{tpu_custom_call.1} parent=1 // pred_check
      _
    $region3: #{tpu_custom_call.1} parent=1 // pred_check_branch
      %10 = sbr.rel (0) target = $region5
    $region4: #{tpu_custom_call.1} parent=1 // pred_region
      _
    $region5: #{tpu_custom_call.1} parent=1 // pred_fallthru
      _
    // Predicated region
    $region6: #{tpu_custom_call.1} parent=1 // pred_check
      _
    $region7: #{tpu_custom_call.1} parent=1 // pred_check_branch
      %12 = sbr.rel (0) target = $region9
    $region8: #{tpu_custom_call.1} parent=1 // pred_region
      _
    $region9: #{tpu_custom_call.1} parent=1 // pred_fallthru
      _
    // Predicated region
    $region10: #{tpu_custom_call.1} parent=1 // pred_check
      _
    $region11: #{tpu_custom_call.1} parent=1 // pred_check_branch
      %14 = sbr.rel (0) target = $region13
    $region12: #{tpu_custom_call.1} parent=1 // pred_region
      _
    $region13: #{tpu_custom_call.1} parent=1 // pred_fallthru
      _
    %v15 = vld [vmem:[%s0] sm:$0xff]
    %v16 = vld [vmem:[%s0 + $0x8] sm:$0x3f]
    %v17 = vld [vmem:[%s0 + $0xe] sm:$0xff]
    %v18 = vld [vmem:[%s0 + $0x16] sm:$0x3f]
    %v19 = vld [vmem:[%s0 + $0x1c] sm:$0xff]
    %v20 = vld [vmem:[%s0 + $0x24] sm:$0x3f]
    %v21 = vld [vmem:[%s0 + $0x2a] sm:$0xff]
    %v22 = vld [vmem:[%s0 + $0x32] sm:$0x3f]
    %v23 = vld [vmem:[%s1] sm:$0xff]
    %v24 = vld [vmem:[%s1 + $0x8] sm:$0xff]
    %v25 = vld [vmem:[%s1 + $0x10] sm:$0xff]
    %v26 = vld [vmem:[%s1 + $0x18] sm:$0xff]
    %v27 = vld [vmem:[%s1 + $0x20] sm:$0xff]
    %v28 = vld [vmem:[%s1 + $0x28] sm:$0xff]
    %v29 = vld [vmem:[%s1 + $0x30] sm:$0xff]
    %v30 = vld [vmem:[%s1 + $0x38] sm:$0xff]
    %v31 = vld [vmem:[%s1 + $0x40] sm:$0xff]
    %v32 = vld [vmem:[%s1 + $0x48] sm:$0xff]
    %v33 = vld [vmem:[%s1 + $0x50] sm:$0xff]
    %v34 = vld [vmem:[%s1 + $0x58] sm:$0xff]
    %v35 = vld [vmem:[%s1 + $0x60] sm:$0xff]
    %v36 = vld [vmem:[%s1 + $0x68] sm:$0xff]
    %v37 = vld [vmem:[%s1 + $0x70] sm:$0xff]
    %v38 = vld [vmem:[%s1 + $0x78] sm:$0xff]
    %v39 = vld [vmem:[%s1 + $0x80] sm:$0xff]
    %v40 = vld [vmem:[%s1 + $0x88] sm:$0xff]
    %v41 = vld [vmem:[%s1 + $0x90] sm:$0xff]
    %v42 = vld [vmem:[%s1 + $0x98] sm:$0xff]
    %v43 = vld [vmem:[%s1 + $0xa0] sm:$0xff]
    %v44 = vld [vmem:[%s1 + $0xa8] sm:$0xff]
    %v45 = vld [vmem:[%s1 + $0xb0] sm:$0xff]
    %v46 = vld [vmem:[%s1 + $0xb8] sm:$0xff]
    %v47 = vld [vmem:[%s1 + $0xc0] sm:$0xff]
    %v48 = vld [vmem:[%s1 + $0xc8] sm:$0xff]
    %v49 = vld [vmem:[%s1 + $0xd0] sm:$0xff]
    %v50 = vld [vmem:[%s1 + $0xd8] sm:$0xff]
    %v51 = vld [vmem:[%s1 + $0xe0] sm:$0xff]
    %v52 = vld [vmem:[%s1 + $0xe8] sm:$0xff]
    %v53 = vld [vmem:[%s1 + $0xf0] sm:$0xff]
    %v54 = vld [vmem:[%s1 + $0xf8] sm:$0xff]
    %v55 = vld [vmem:[%s1 + $0x100] sm:$0xff]
    %v56 = vld [vmem:[%s1 + $0x108] sm:$0xff]
    %v57 = vld [vmem:[%s1 + $0x110] sm:$0xff]
    %v58 = vld [vmem:[%s1 + $0x118] sm:$0xff]
    %v59 = vld [vmem:[%s1 + $0x120] sm:$0xff]
    %v60 = vld [vmem:[%s1 + $0x128] sm:$0xff]
    %v61 = vld [vmem:[%s1 + $0x130] sm:$0xff]
    %v62 = vld [vmem:[%s1 + $0x138] sm:$0xff]
    %v63 = vld [vmem:[%s1 + $0x140] sm:$0xff]
    %v64 = vld [vmem:[%s1 + $0x148] sm:$0xff]
    %v65 = vld [vmem:[%s1 + $0x150] sm:$0xff]
    %v66 = vld [vmem:[%s1 + $0x158] sm:$0xff]
    %v67 = vld [vmem:[%s1 + $0x160] sm:$0xff]
    %v68 = vld [vmem:[%s1 + $0x168] sm:$0xff]
    %v69 = vld [vmem:[%s1 + $0x170] sm:$0xff]
    %v70 = vld [vmem:[%s1 + $0x178] sm:$0xff]
    %v71 = vld [vmem:[%s1 + $0x180] sm:$0xff]
    %v72 = vld [vmem:[%s1 + $0x188] sm:$0xff]
    %v73 = vld [vmem:[%s1 + $0x190] sm:$0xff]
    %v74 = vld [vmem:[%s1 + $0x198] sm:$0xff]
    %v75 = vld [vmem:[%s1 + $0x1a0] sm:$0xff]
    %v76 = vld [vmem:[%s1 + $0x1a8] sm:$0xff]
    %v77 = vld [vmem:[%s1 + $0x1b0] sm:$0xff]
    %v78 = vld [vmem:[%s1 + $0x1b8] sm:$0xff]
    %v79 = vld [vmem:[%s1 + $0x1c0] sm:$0xff]
    %v80 = vld [vmem:[%s1 + $0x1c8] sm:$0xff]
    %v81 = vld [vmem:[%s1 + $0x1d0] sm:$0xff]
    %v82 = vld [vmem:[%s1 + $0x1d8] sm:$0xff]
    %v83 = vld [vmem:[%s1 + $0x1e0] sm:$0xff]
    %v84 = vld [vmem:[%s1 + $0x1e8] sm:$0xff]
    %v85 = vld [vmem:[%s1 + $0x1f0] sm:$0xff]
    %v86 = vld [vmem:[%s1 + $0x1f8] sm:$0xff]
    %v87 = vld [vmem:[%s1 + $0x200] sm:$0xff]
    %v88 = vld [vmem:[%s1 + $0x208] sm:$0xff]
    %v89 = vld [vmem:[%s1 + $0x210] sm:$0xff]
    %v90 = vld [vmem:[%s1 + $0x218] sm:$0xff]
    %v91 = vld [vmem:[%s1 + $0x220] sm:$0xff]
    %v92 = vld [vmem:[%s1 + $0x228] sm:$0xff]
    %v93 = vld [vmem:[%s1 + $0x230] sm:$0xff]
    %v94 = vld [vmem:[%s1 + $0x238] sm:$0xff]
    %v95 = vld [vmem:[%s1 + $0x240] sm:$0xff]
    %v96 = vld [vmem:[%s1 + $0x248] sm:$0xff]
    %v97 = vld [vmem:[%s1 + $0x250] sm:$0xff]
    %v98 = vld [vmem:[%s1 + $0x258] sm:$0xff]
    %v99 = vld [vmem:[%s1 + $0x260] sm:$0xff]
    %v100 = vld [vmem:[%s1 + $0x268] sm:$0xff]
    %v101 = vld [vmem:[%s1 + $0x270] sm:$0xff]
    %v102 = vld [vmem:[%s1 + $0x278] sm:$0xff]
    %v103 = vld [vmem:[%s1 + $0x280] sm:$0xff]
    %v104 = vld [vmem:[%s1 + $0x288] sm:$0xff]
    %v105 = vld [vmem:[%s1 + $0x290] sm:$0xff]
    %v106 = vld [vmem:[%s1 + $0x298] sm:$0xff]
    %v107 = vld [vmem:[%s1 + $0x2a0] sm:$0xff]
    %v108 = vld [vmem:[%s1 + $0x2a8] sm:$0xff]
    %v109 = vld [vmem:[%s1 + $0x2b0] sm:$0xff]
    %v110 = vld [vmem:[%s1 + $0x2b8] sm:$0xff]
    %v111 = vld [vmem:[%s1 + $0x2c0] sm:$0xff]
    %v112 = vld [vmem:[%s1 + $0x2c8] sm:$0xff]
    %v113 = vld [vmem:[%s1 + $0x2d0] sm:$0xff]
    %v114 = vld [vmem:[%s1 + $0x2d8] sm:$0xff]
    %v115 = vld [vmem:[%s1 + $0x2e0] sm:$0xff]
    %v116 = vld [vmem:[%s1 + $0x2e8] sm:$0xff]
    %v117 = vld [vmem:[%s1 + $0x2f0] sm:$0xff]
    %v118 = vld [vmem:[%s1 + $0x2f8] sm:$0xff]
    %v119 = vld [vmem:[%s1 + $0x300] sm:$0xff]
    %v120 = vld [vmem:[%s1 + $0x308] sm:$0xff]
    %v121 = vld [vmem:[%s2] sm:$0x1]
    %v123 = vlaneseq
    %v124 = vshrl.u32 %v123, 7
    %v125 = vsub.s32 0, %v124
    %v126 = vrot.slane %v121, %v125
    %v136 = vcombine.low %v15, %v17
    %v137 = vcombine.high %v15, %v17
    %v138 = vcombine.low %v19, %v21
    %v139 = vcombine.high %v19, %v21
    %v141 = vunpack.c.l.s4 1983009808
    %v142 = vunpack.c.0.s8 %v141
    %v143 = vlaneseq
    %v144 = vshrl.u32 %v143, 7
    %v145 = vsub.s32 %v142, %v144
    %v146 = vrot.slane %v136, %v145
    %v148 = vunpack.c.l.s4 1983009808
    %v149 = vunpack.c.0.s8 %v148
    %v150 = vlaneseq
    %v151 = vshrl.u32 %v150, 7
    %v152 = vsub.s32 %v149, %v151
    %v153 = vrot.slane %v137, %v152
    %v155 = vunpack.c.l.s4 1983009808
    %v156 = vunpack.c.0.s8 %v155
    %v157 = vlaneseq
    %v158 = vshrl.u32 %v157, 7
    %v159 = vsub.s32 %v156, %v158
    %v160 = vrot.slane %v138, %v159
    %v162 = vunpack.c.l.s4 1983009808
    %v163 = vunpack.c.0.s8 %v162
    %v164 = vlaneseq
    %v165 = vshrl.u32 %v164, 7
    %v166 = vsub.s32 %v163, %v165
    %v167 = vrot.slane %v139, %v166
    %v168 = vcombine.low %v146, %v160
    %v169 = vcombine.high %v146, %v160
    %v170 = vcombine.low %v153, %v167
    %v171 = vcombine.high %v153, %v167
    %v172 = vcombine.low %v16, %v18
    %v173 = vcombine.high %v16, %v18
    %v174 = vcombine.low %v20, %v22
    %v175 = vcombine.high %v20, %v22
    %v177 = vunpack.c.l.s4 1983009808
    %v178 = vunpack.c.0.s8 %v177
    %v179 = vlaneseq
    %v180 = vshrl.u32 %v179, 7
    %v181 = vsub.s32 %v178, %v180
    %v182 = vrot.slane %v172, %v181
    %v184 = vunpack.c.l.s4 1983009808
    %v185 = vunpack.c.0.s8 %v184
    %v186 = vlaneseq
    %v187 = vshrl.u32 %v186, 7
    %v188 = vsub.s32 %v185, %v187
    %v189 = vrot.slane %v173, %v188
    %v191 = vunpack.c.l.s4 1983009808
    %v192 = vunpack.c.0.s8 %v191
    %v193 = vlaneseq
    %v194 = vshrl.u32 %v193, 7
    %v195 = vsub.s32 %v192, %v194
    %v196 = vrot.slane %v174, %v195
    %v198 = vunpack.c.l.s4 1983009808
    %v199 = vunpack.c.0.s8 %v198
    %v200 = vlaneseq
    %v201 = vshrl.u32 %v200, 7
    %v202 = vsub.s32 %v199, %v201
    %v203 = vrot.slane %v175, %v202
    %v204 = vcombine.low %v182, %v196
    %v205 = vcombine.high %v182, %v196
    %v206 = vcombine.low %v189, %v203
    %vm213 = vcmask 130048
    %v214 = vsel %vm213, %v206, 0
    %216 = vmatprep.subr.mxu0 0.0
    %v217 = vand.u32 %v23, 4294901760
    %218 = vmatpush1.msra.mxu0 %v217
    %219 = vmatprep.subr.mxu0 0.0
    %v220 = vand.u32 %v24, 4294901760
    %221 = vmatpush1.msra.mxu0 %v220
    %222 = vmatprep.subr.mxu0 0.0
    %v223 = vand.u32 %v25, 4294901760
    %224 = vmatpush1.msra.mxu0 %v223
    %225 = vmatprep.subr.mxu0 0.0
    %v226 = vand.u32 %v26, 4294901760
    %227 = vmatpush1.msra.mxu0 %v226
    %228 = vmatprep.subr.mxu0 0.0
    %v229 = vand.u32 %v27, 4294901760
    %230 = vmatpush1.msra.mxu0 %v229
    %231 = vmatprep.subr.mxu0 0.0
    %v232 = vand.u32 %v28, 4294901760
    %233 = vmatpush1.msra.mxu0 %v232
    %234 = vmatprep.subr.mxu0 0.0
    %v235 = vand.u32 %v29, 4294901760
    %236 = vmatpush1.msra.mxu0 %v235
    %237 = vmatprep.subr.mxu0 0.0
    %v238 = vand.u32 %v30, 4294901760
    %239 = vmatpush1.msra.mxu0 %v238
    %240 = vmatprep.subr.mxu0 0.0
    %v241 = vand.u32 %v31, 4294901760
    %242 = vmatpush1.msra.mxu0 %v241
    %243 = vmatprep.subr.mxu0 0.0
    %v244 = vand.u32 %v32, 4294901760
    %245 = vmatpush1.msra.mxu0 %v244
    %246 = vmatprep.subr.mxu0 0.0
    %v247 = vand.u32 %v33, 4294901760
    %248 = vmatpush1.msra.mxu0 %v247
    %249 = vmatprep.subr.mxu0 0.0
    %v250 = vand.u32 %v34, 4294901760
    %251 = vmatpush1.msra.mxu0 %v250
    %252 = vmatprep.subr.mxu0 0.0
    %v253 = vand.u32 %v35, 4294901760
    %254 = vmatpush1.msra.mxu0 %v253
    %255 = vmatprep.subr.mxu0 0.0
    %v256 = vand.u32 %v36, 4294901760
    %257 = vmatpush1.msra.mxu0 %v256
    %258 = vmatprep.subr.mxu0 0.0
    %v259 = vand.u32 %v37, 4294901760
    %260 = vmatpush1.msra.mxu0 %v259
    %261 = vmatprep.subr.mxu0 0.0
    %v262 = vand.u32 %v38, 4294901760
    %263 = vmatpush1.msra.mxu0 %v262
    %264 = vmatprep.subr.mxu0 0.0
    %v265 = vand.u32 %v39, 4294901760
    %266 = vmatpush1.msra.mxu0 %v265
    %267 = vmatprep.subr.mxu0 0.0
    %v268 = vand.u32 %v40, 4294901760
    %269 = vmatpush1.msra.mxu0 %v268
    %270 = vmatprep.subr.mxu0 0.0
    %v271 = vand.u32 %v41, 4294901760
    %272 = vmatpush1.msra.mxu0 %v271
    %273 = vmatprep.subr.mxu0 0.0
    %v274 = vand.u32 %v42, 4294901760
    %275 = vmatpush1.msra.mxu0 %v274
    %276 = vmatprep.subr.mxu0 0.0
    %v277 = vand.u32 %v43, 4294901760
    %278 = vmatpush1.msra.mxu0 %v277
    %279 = vmatprep.subr.mxu0 0.0
    %v280 = vand.u32 %v44, 4294901760
    %281 = vmatpush1.msra.mxu0 %v280
    %282 = vmatprep.subr.mxu0 0.0
    %v283 = vand.u32 %v45, 4294901760
    %284 = vmatpush1.msra.mxu0 %v283
    %285 = vmatprep.subr.mxu0 0.0
    %v286 = vand.u32 %v46, 4294901760
    %287 = vmatpush1.msra.mxu0 %v286
    %288 = vmatprep.subr.mxu0 0.0
    %v289 = vand.u32 %v47, 4294901760
    %290 = vmatpush1.msra.mxu0 %v289
    %291 = vmatprep.subr.mxu0 0.0
    %v292 = vand.u32 %v48, 4294901760
    %293 = vmatpush1.msra.mxu0 %v292
    %294 = vmatprep.subr.mxu0 0.0
    %v295 = vand.u32 %v49, 4294901760
    %296 = vmatpush1.msra.mxu0 %v295
    %297 = vmatprep.subr.mxu0 0.0
    %v298 = vand.u32 %v50, 4294901760
    %299 = vmatpush1.msra.mxu0 %v298
    %300 = vmatprep.subr.mxu0 0.0
    %v301 = vand.u32 %v51, 4294901760
    %302 = vmatpush1.msra.mxu0 %v301
    %303 = vmatprep.subr.mxu0 0.0
    %v304 = vand.u32 %v52, 4294901760
    %305 = vmatpush1.msra.mxu0 %v304
    %306 = vmatprep.subr.mxu0 0.0
    %v307 = vand.u32 %v53, 4294901760
    %308 = vmatpush1.msra.mxu0 %v307
    %309 = vmatprep.subr.mxu0 0.0
    %v310 = vand.u32 %v54, 4294901760
    %311 = vmatpush1.msra.mxu0 %v310
    %v312 = vand.u32 %v169, 4294901760
    %v313 = vsub.f32 %v169, %v312
    %v314 = vand.u32 %v313, 4294901760
    %v315 = vsub.f32 %v313, %v314
    %v316 = vand.u32 %v315, 4294901760
    %317 = vmatprep.mubr.f32.mxu0 %v316
    %v318 = vand.u32 %v168, 4294901760
    %v319 = vsub.f32 %v168, %v318
    %v320 = vand.u32 %v319, 4294901760
    %v321 = vsub.f32 %v319, %v320
    %v322 = vand.u32 %v321, 4294901760
    %323 = vmatmul.mubr.f32.gmra.mrb[0].mxu0 %v322
    %v324 = vpop.f32.mrb[0].mxu0
    %v325 = vadd.f32 %v126, %v324
    %v326 = vpop.f32.mrb[0].mxu0
    %327 = vdwg.mxu0
    %328 = vmatprep.subr.mxu0 0.0
    %v329 = vand.u32 %v23, 4294901760
    %v330 = vsub.f32 %v23, %v329
    %v331 = vand.u32 %v330, 4294901760
    %v332 = vsub.f32 %v330, %v331
    %v333 = vand.u32 %v332, 4294901760
    %334 = vmatpush1.msra.mxu0 %v333
    %335 = vmatprep.subr.mxu0 0.0
    %v336 = vand.u32 %v24, 4294901760
    %v337 = vsub.f32 %v24, %v336
    %v338 = vand.u32 %v337, 4294901760
    %v339 = vsub.f32 %v337, %v338
    %v340 = vand.u32 %v339, 4294901760
    %341 = vmatpush1.msra.mxu0 %v340
    %342 = vmatprep.subr.mxu0 0.0
    %v343 = vand.u32 %v25, 4294901760
    %v344 = vsub.f32 %v25, %v343
    %v345 = vand.u32 %v344, 4294901760
    %v346 = vsub.f32 %v344, %v345
    %v347 = vand.u32 %v346, 4294901760
    %348 = vmatpush1.msra.mxu0 %v347
    %349 = vmatprep.subr.mxu0 0.0
    %v350 = vand.u32 %v26, 4294901760
    %v351 = vsub.f32 %v26, %v350
    %v352 = vand.u32 %v351, 4294901760
    %v353 = vsub.f32 %v351, %v352
    %v354 = vand.u32 %v353, 4294901760
    %355 = vmatpush1.msra.mxu0 %v354
    %356 = vmatprep.subr.mxu0 0.0
    %v357 = vand.u32 %v27, 4294901760
    %v358 = vsub.f32 %v27, %v357
    %v359 = vand.u32 %v358, 4294901760
    %v360 = vsub.f32 %v358, %v359
    %v361 = vand.u32 %v360, 4294901760
    %362 = vmatpush1.msra.mxu0 %v361
    %363 = vmatprep.subr.mxu0 0.0
    %v364 = vand.u32 %v28, 4294901760
    %v365 = vsub.f32 %v28, %v364
    %v366 = vand.u32 %v365, 4294901760
    %v367 = vsub.f32 %v365, %v366
    %v368 = vand.u32 %v367, 4294901760
    %369 = vmatpush1.msra.mxu0 %v368
    %370 = vmatprep.subr.mxu0 0.0
    %v371 = vand.u32 %v29, 4294901760
    %v372 = vsub.f32 %v29, %v371
    %v373 = vand.u32 %v372, 4294901760
    %v374 = vsub.f32 %v372, %v373
    %v375 = vand.u32 %v374, 4294901760
    %376 = vmatpush1.msra.mxu0 %v375
    %377 = vmatprep.subr.mxu0 0.0
    %v378 = vand.u32 %v30, 4294901760
    %v379 = vsub.f32 %v30, %v378
    %v380 = vand.u32 %v379, 4294901760
    %v381 = vsub.f32 %v379, %v380
    %v382 = vand.u32 %v381, 4294901760
    %383 = vmatpush1.msra.mxu0 %v382
    %384 = vmatprep.subr.mxu0 0.0
    %v385 = vand.u32 %v31, 4294901760
    %v386 = vsub.f32 %v31, %v385
    %v387 = vand.u32 %v386, 4294901760
    %v388 = vsub.f32 %v386, %v387
    %v389 = vand.u32 %v388, 4294901760
    %390 = vmatpush1.msra.mxu0 %v389
    %391 = vmatprep.subr.mxu0 0.0
    %v392 = vand.u32 %v32, 4294901760
    %v393 = vsub.f32 %v32, %v392
    %v394 = vand.u32 %v393, 4294901760
    %v395 = vsub.f32 %v393, %v394
    %v396 = vand.u32 %v395, 4294901760
    %397 = vmatpush1.msra.mxu0 %v396
    %398 = vmatprep.subr.mxu0 0.0
    %v399 = vand.u32 %v33, 4294901760
    %v400 = vsub.f32 %v33, %v399
    %v401 = vand.u32 %v400, 4294901760
    %v402 = vsub.f32 %v400, %v401
    %v403 = vand.u32 %v402, 4294901760
    %404 = vmatpush1.msra.mxu0 %v403
    %405 = vmatprep.subr.mxu0 0.0
    %v406 = vand.u32 %v34, 4294901760
    %v407 = vsub.f32 %v34, %v406
    %v408 = vand.u32 %v407, 4294901760
    %v409 = vsub.f32 %v407, %v408
    %v410 = vand.u32 %v409, 4294901760
    %411 = vmatpush1.msra.mxu0 %v410
    %412 = vmatprep.subr.mxu0 0.0
    %v413 = vand.u32 %v35, 4294901760
    %v414 = vsub.f32 %v35, %v413
    %v415 = vand.u32 %v414, 4294901760
    %v416 = vsub.f32 %v414, %v415
    %v417 = vand.u32 %v416, 4294901760
    %418 = vmatpush1.msra.mxu0 %v417
    %419 = vmatprep.subr.mxu0 0.0
    %v420 = vand.u32 %v36, 4294901760
    %v421 = vsub.f32 %v36, %v420
    %v422 = vand.u32 %v421, 4294901760
    %v423 = vsub.f32 %v421, %v422
    %v424 = vand.u32 %v423, 4294901760
    %425 = vmatpush1.msra.mxu0 %v424
    %426 = vmatprep.subr.mxu0 0.0
    %v427 = vand.u32 %v37, 4294901760
    %v428 = vsub.f32 %v37, %v427
    %v429 = vand.u32 %v428, 4294901760
    %v430 = vsub.f32 %v428, %v429
    %v431 = vand.u32 %v430, 4294901760
    %432 = vmatpush1.msra.mxu0 %v431
    %433 = vmatprep.subr.mxu0 0.0
    %v434 = vand.u32 %v38, 4294901760
    %v435 = vsub.f32 %v38, %v434
    %v436 = vand.u32 %v435, 4294901760
    %v437 = vsub.f32 %v435, %v436
    %v438 = vand.u32 %v437, 4294901760
    %439 = vmatpush1.msra.mxu0 %v438
    %440 = vmatprep.subr.mxu0 0.0
    %v441 = vand.u32 %v39, 4294901760
    %v442 = vsub.f32 %v39, %v441
    %v443 = vand.u32 %v442, 4294901760
    %v444 = vsub.f32 %v442, %v443
    %v445 = vand.u32 %v444, 4294901760
    %446 = vmatpush1.msra.mxu0 %v445
    %447 = vmatprep.subr.mxu0 0.0
    %v448 = vand.u32 %v40, 4294901760
    %v449 = vsub.f32 %v40, %v448
    %v450 = vand.u32 %v449, 4294901760
    %v451 = vsub.f32 %v449, %v450
    %v452 = vand.u32 %v451, 4294901760
    %453 = vmatpush1.msra.mxu0 %v452
    %454 = vmatprep.subr.mxu0 0.0
    %v455 = vand.u32 %v41, 4294901760
    %v456 = vsub.f32 %v41, %v455
    %v457 = vand.u32 %v456, 4294901760
    %v458 = vsub.f32 %v456, %v457
    %v459 = vand.u32 %v458, 4294901760
    %460 = vmatpush1.msra.mxu0 %v459
    %461 = vmatprep.subr.mxu0 0.0
    %v462 = vand.u32 %v42, 4294901760
    %v463 = vsub.f32 %v42, %v462
    %v464 = vand.u32 %v463, 4294901760
    %v465 = vsub.f32 %v463, %v464
    %v466 = vand.u32 %v465, 4294901760
    %467 = vmatpush1.msra.mxu0 %v466
    %468 = vmatprep.subr.mxu0 0.0
    %v469 = vand.u32 %v43, 4294901760
    %v470 = vsub.f32 %v43, %v469
    %v471 = vand.u32 %v470, 4294901760
    %v472 = vsub.f32 %v470, %v471
    %v473 = vand.u32 %v472, 4294901760
    %474 = vmatpush1.msra.mxu0 %v473
    %475 = vmatprep.subr.mxu0 0.0
    %v476 = vand.u32 %v44, 4294901760
    %v477 = vsub.f32 %v44, %v476
    %v478 = vand.u32 %v477, 4294901760
    %v479 = vsub.f32 %v477, %v478
    %v480 = vand.u32 %v479, 4294901760
    %481 = vmatpush1.msra.mxu0 %v480
    %482 = vmatprep.subr.mxu0 0.0
    %v483 = vand.u32 %v45, 4294901760
    %v484 = vsub.f32 %v45, %v483
    %v485 = vand.u32 %v484, 4294901760
    %v486 = vsub.f32 %v484, %v485
    %v487 = vand.u32 %v486, 4294901760
    %488 = vmatpush1.msra.mxu0 %v487
    %489 = vmatprep.subr.mxu0 0.0
    %v490 = vand.u32 %v46, 4294901760
    %v491 = vsub.f32 %v46, %v490
    %v492 = vand.u32 %v491, 4294901760
    %v493 = vsub.f32 %v491, %v492
    %v494 = vand.u32 %v493, 4294901760
    %495 = vmatpush1.msra.mxu0 %v494
    %496 = vmatprep.subr.mxu0 0.0
    %v497 = vand.u32 %v47, 4294901760
    %v498 = vsub.f32 %v47, %v497
    %v499 = vand.u32 %v498, 4294901760
    %v500 = vsub.f32 %v498, %v499
    %v501 = vand.u32 %v500, 4294901760
    %502 = vmatpush1.msra.mxu0 %v501
    %503 = vmatprep.subr.mxu0 0.0
    %v504 = vand.u32 %v48, 4294901760
    %v505 = vsub.f32 %v48, %v504
    %v506 = vand.u32 %v505, 4294901760
    %v507 = vsub.f32 %v505, %v506
    %v508 = vand.u32 %v507, 4294901760
    %509 = vmatpush1.msra.mxu0 %v508
    %510 = vmatprep.subr.mxu0 0.0
    %v511 = vand.u32 %v49, 4294901760
    %v512 = vsub.f32 %v49, %v511
    %v513 = vand.u32 %v512, 4294901760
    %v514 = vsub.f32 %v512, %v513
    %v515 = vand.u32 %v514, 4294901760
    %516 = vmatpush1.msra.mxu0 %v515
    %517 = vmatprep.subr.mxu0 0.0
    %v518 = vand.u32 %v50, 4294901760
    %v519 = vsub.f32 %v50, %v518
    %v520 = vand.u32 %v519, 4294901760
    %v521 = vsub.f32 %v519, %v520
    %v522 = vand.u32 %v521, 4294901760
    %523 = vmatpush1.msra.mxu0 %v522
    %524 = vmatprep.subr.mxu0 0.0
    %v525 = vand.u32 %v51, 4294901760
    %v526 = vsub.f32 %v51, %v525
    %v527 = vand.u32 %v526, 4294901760
    %v528 = vsub.f32 %v526, %v527
    %v529 = vand.u32 %v528, 4294901760
    %530 = vmatpush1.msra.mxu0 %v529
    %531 = vmatprep.subr.mxu0 0.0
    %v532 = vand.u32 %v52, 4294901760
    %v533 = vsub.f32 %v52, %v532
    %v534 = vand.u32 %v533, 4294901760
    %v535 = vsub.f32 %v533, %v534
    %v536 = vand.u32 %v535, 4294901760
    %537 = vmatpush1.msra.mxu0 %v536
    %538 = vmatprep.subr.mxu0 0.0
    %v539 = vand.u32 %v53, 4294901760
    %v540 = vsub.f32 %v53, %v539
    %v541 = vand.u32 %v540, 4294901760
    %v542 = vsub.f32 %v540, %v541
    %v543 = vand.u32 %v542, 4294901760
    %544 = vmatpush1.msra.mxu0 %v543
    %545 = vmatprep.subr.mxu0 0.0
    %v546 = vand.u32 %v54, 4294901760
    %v547 = vsub.f32 %v54, %v546
    %v548 = vand.u32 %v547, 4294901760
    %v549 = vsub.f32 %v547, %v548
    %v550 = vand.u32 %v549, 4294901760
    %551 = vmatpush1.msra.mxu0 %v550
    %v552 = vand.u32 %v169, 4294901760
    %553 = vmatprep.mubr.f32.mxu0 %v552
    %v554 = vand.u32 %v168, 4294901760
    %555 = vmatmul.mubr.f32.gmra.mrb[0].mxu0 %v554
    %v556 = vpop.f32.mrb[0].mxu0
    %v557 = vadd.f32 %v325, %v556
    %v558 = vpop.f32.mrb[0].mxu0
    %559 = vdwg.mxu0
    %560 = vmatprep.subr.mxu0 0.0
    %v561 = vand.u32 %v23, 4294901760
    %v562 = vsub.f32 %v23, %v561
    %563 = vmatpush1.msra.mxu0 %v562
    %564 = vmatprep.subr.mxu0 0.0
    %v565 = vand.u32 %v24, 4294901760
    %v566 = vsub.f32 %v24, %v565
    %567 = vmatpush1.msra.mxu0 %v566
    %568 = vmatprep.subr.mxu0 0.0
    %v569 = vand.u32 %v25, 4294901760
    %v570 = vsub.f32 %v25, %v569
    %571 = vmatpush1.msra.mxu0 %v570
    %572 = vmatprep.subr.mxu0 0.0
    %v573 = vand.u32 %v26, 4294901760
    %v574 = vsub.f32 %v26, %v573
    %575 = vmatpush1.msra.mxu0 %v574
    %576 = vmatprep.subr.mxu0 0.0
    %v577 = vand.u32 %v27, 4294901760
    %v578 = vsub.f32 %v27, %v577
    %579 = vmatpush1.msra.mxu0 %v578
    %580 = vmatprep.subr.mxu0 0.0
    %v581 = vand.u32 %v28, 4294901760
    %v582 = vsub.f32 %v28, %v581
    %583 = vmatpush1.msra.mxu0 %v582
    %584 = vmatprep.subr.mxu0 0.0
    %v585 = vand.u32 %v29, 4294901760
    %v586 = vsub.f32 %v29, %v585
    %587 = vmatpush1.msra.mxu0 %v586
    %588 = vmatprep.subr.mxu0 0.0
    %v589 = vand.u32 %v30, 4294901760
    %v590 = vsub.f32 %v30, %v589
    %591 = vmatpush1.msra.mxu0 %v590
    %592 = vmatprep.subr.mxu0 0.0
    %v593 = vand.u32 %v31, 4294901760
    %v594 = vsub.f32 %v31, %v593
    %595 = vmatpush1.msra.mxu0 %v594
    %596 = vmatprep.subr.mxu0 0.0
    %v597 = vand.u32 %v32, 4294901760
    %v598 = vsub.f32 %v32, %v597
    %599 = vmatpush1.msra.mxu0 %v598
    %600 = vmatprep.subr.mxu0 0.0
    %v601 = vand.u32 %v33, 4294901760
    %v602 = vsub.f32 %v33, %v601
    %603 = vmatpush1.msra.mxu0 %v602
    %604 = vmatprep.subr.mxu0 0.0
    %v605 = vand.u32 %v34, 4294901760
    %v606 = vsub.f32 %v34, %v605
    %607 = vmatpush1.msra.mxu0 %v606
    %608 = vmatprep.subr.mxu0 0.0
    %v609 = vand.u32 %v35, 4294901760
    %v610 = vsub.f32 %v35, %v609
    %611 = vmatpush1.msra.mxu0 %v610
    %612 = vmatprep.subr.mxu0 0.0
    %v613 = vand.u32 %v36, 4294901760
    %v614 = vsub.f32 %v36, %v613
    %615 = vmatpush1.msra.mxu0 %v614
    %616 = vmatprep.subr.mxu0 0.0
    %v617 = vand.u32 %v37, 4294901760
    %v618 = vsub.f32 %v37, %v617
    %619 = vmatpush1.msra.mxu0 %v618
    %620 = vmatprep.subr.mxu0 0.0
    %v621 = vand.u32 %v38, 4294901760
    %v622 = vsub.f32 %v38, %v621
    %623 = vmatpush1.msra.mxu0 %v622
    %624 = vmatprep.subr.mxu0 0.0
    %v625 = vand.u32 %v39, 4294901760
    %v626 = vsub.f32 %v39, %v625
    %627 = vmatpush1.msra.mxu0 %v626
    %628 = vmatprep.subr.mxu0 0.0
    %v629 = vand.u32 %v40, 4294901760
    %v630 = vsub.f32 %v40, %v629
    %631 = vmatpush1.msra.mxu0 %v630
    %632 = vmatprep.subr.mxu0 0.0
    %v633 = vand.u32 %v41, 4294901760
    %v634 = vsub.f32 %v41, %v633
    %635 = vmatpush1.msra.mxu0 %v634
    %636 = vmatprep.subr.mxu0 0.0
    %v637 = vand.u32 %v42, 4294901760
    %v638 = vsub.f32 %v42, %v637
    %639 = vmatpush1.msra.mxu0 %v638
    %640 = vmatprep.subr.mxu0 0.0
    %v641 = vand.u32 %v43, 4294901760
    %v642 = vsub.f32 %v43, %v641
    %643 = vmatpush1.msra.mxu0 %v642
    %644 = vmatprep.subr.mxu0 0.0
    %v645 = vand.u32 %v44, 4294901760
    %v646 = vsub.f32 %v44, %v645
    %647 = vmatpush1.msra.mxu0 %v646
    %648 = vmatprep.subr.mxu0 0.0
    %v649 = vand.u32 %v45, 4294901760
    %v650 = vsub.f32 %v45, %v649
    %651 = vmatpush1.msra.mxu0 %v650
    %652 = vmatprep.subr.mxu0 0.0
    %v653 = vand.u32 %v46, 4294901760
    %v654 = vsub.f32 %v46, %v653
    %655 = vmatpush1.msra.mxu0 %v654
    %656 = vmatprep.subr.mxu0 0.0
    %v657 = vand.u32 %v47, 4294901760
    %v658 = vsub.f32 %v47, %v657
    %659 = vmatpush1.msra.mxu0 %v658
    %660 = vmatprep.subr.mxu0 0.0
    %v661 = vand.u32 %v48, 4294901760
    %v662 = vsub.f32 %v48, %v661
    %663 = vmatpush1.msra.mxu0 %v662
    %664 = vmatprep.subr.mxu0 0.0
    %v665 = vand.u32 %v49, 4294901760
    %v666 = vsub.f32 %v49, %v665
    %667 = vmatpush1.msra.mxu0 %v666
    %668 = vmatprep.subr.mxu0 0.0
    %v669 = vand.u32 %v50, 4294901760
    %v670 = vsub.f32 %v50, %v669
    %671 = vmatpush1.msra.mxu0 %v670
    %672 = vmatprep.subr.mxu0 0.0
    %v673 = vand.u32 %v51, 4294901760
    %v674 = vsub.f32 %v51, %v673
    %675 = vmatpush1.msra.mxu0 %v674
    %676 = vmatprep.subr.mxu0 0.0
    %v677 = vand.u32 %v52, 4294901760
    %v678 = vsub.f32 %v52, %v677
    %679 = vmatpush1.msra.mxu0 %v678
    %680 = vmatprep.subr.mxu0 0.0
    %v681 = vand.u32 %v53, 4294901760
    %v682 = vsub.f32 %v53, %v681
    %683 = vmatpush1.msra.mxu0 %v682
    %684 = vmatprep.subr.mxu0 0.0
    %v685 = vand.u32 %v54, 4294901760
    %v686 = vsub.f32 %v54, %v685
    %687 = vmatpush1.msra.mxu0 %v686
    %v688 = vand.u32 %v169, 4294901760
    %v689 = vsub.f32 %v169, %v688
    %690 = vmatprep.mubr.f32.mxu0 %v689
    %v691 = vand.u32 %v168, 4294901760
    %v692 = vsub.f32 %v168, %v691
    %693 = vmatmul.mubr.f32.gmra.mrb[0].mxu0 %v692
    %v694 = vpop.f32.mrb[0].mxu0
    %v695 = vadd.f32 %v557, %v694
    %v696 = vpop.f32.mrb[0].mxu0
    %697 = vdwg.mxu0
    %698 = vmatprep.subr.mxu0 0.0
    %v699 = vand.u32 %v23, 4294901760
    %700 = vmatpush1.msra.mxu0 %v699
    %701 = vmatprep.subr.mxu0 0.0
    %v702 = vand.u32 %v24, 4294901760
    %703 = vmatpush1.msra.mxu0 %v702
    %704 = vmatprep.subr.mxu0 0.0
    %v705 = vand.u32 %v25, 4294901760
    %706 = vmatpush1.msra.mxu0 %v705
    %707 = vmatprep.subr.mxu0 0.0
    %v708 = vand.u32 %v26, 4294901760
    %709 = vmatpush1.msra.mxu0 %v708
    %710 = vmatprep.subr.mxu0 0.0
    %v711 = vand.u32 %v27, 4294901760
    %712 = vmatpush1.msra.mxu0 %v711
    %713 = vmatprep.subr.mxu0 0.0
    %v714 = vand.u32 %v28, 4294901760
    %715 = vmatpush1.msra.mxu0 %v714
    %716 = vmatprep.subr.mxu0 0.0
    %v717 = vand.u32 %v29, 4294901760
    %718 = vmatpush1.msra.mxu0 %v717
    %719 = vmatprep.subr.mxu0 0.0
    %v720 = vand.u32 %v30, 4294901760
    %721 = vmatpush1.msra.mxu0 %v720
    %722 = vmatprep.subr.mxu0 0.0
    %v723 = vand.u32 %v31, 4294901760
    %724 = vmatpush1.msra.mxu0 %v723
    %725 = vmatprep.subr.mxu0 0.0
    %v726 = vand.u32 %v32, 4294901760
    %727 = vmatpush1.msra.mxu0 %v726
    %728 = vmatprep.subr.mxu0 0.0
    %v729 = vand.u32 %v33, 4294901760
    %730 = vmatpush1.msra.mxu0 %v729
    %731 = vmatprep.subr.mxu0 0.0
    %v732 = vand.u32 %v34, 4294901760
    %733 = vmatpush1.msra.mxu0 %v732
    %734 = vmatprep.subr.mxu0 0.0
    %v735 = vand.u32 %v35, 4294901760
    %736 = vmatpush1.msra.mxu0 %v735
    %737 = vmatprep.subr.mxu0 0.0
    %v738 = vand.u32 %v36, 4294901760
    %739 = vmatpush1.msra.mxu0 %v738
    %740 = vmatprep.subr.mxu0 0.0
    %v741 = vand.u32 %v37, 4294901760
    %742 = vmatpush1.msra.mxu0 %v741
    %743 = vmatprep.subr.mxu0 0.0
    %v744 = vand.u32 %v38, 4294901760
    %745 = vmatpush1.msra.mxu0 %v744
    %746 = vmatprep.subr.mxu0 0.0
    %v747 = vand.u32 %v39, 4294901760
    %748 = vmatpush1.msra.mxu0 %v747
    %749 = vmatprep.subr.mxu0 0.0
    %v750 = vand.u32 %v40, 4294901760
    %751 = vmatpush1.msra.mxu0 %v750
    %752 = vmatprep.subr.mxu0 0.0
    %v753 = vand.u32 %v41, 4294901760
    %754 = vmatpush1.msra.mxu0 %v753
    %755 = vmatprep.subr.mxu0 0.0
    %v756 = vand.u32 %v42, 4294901760
    %757 = vmatpush1.msra.mxu0 %v756
    %758 = vmatprep.subr.mxu0 0.0
    %v759 = vand.u32 %v43, 4294901760
    %760 = vmatpush1.msra.mxu0 %v759
    %761 = vmatprep.subr.mxu0 0.0
    %v762 = vand.u32 %v44, 4294901760
    %763 = vmatpush1.msra.mxu0 %v762
    %764 = vmatprep.subr.mxu0 0.0
    %v765 = vand.u32 %v45, 4294901760
    %766 = vmatpush1.msra.mxu0 %v765
    %767 = vmatprep.subr.mxu0 0.0
    %v768 = vand.u32 %v46, 4294901760
    %769 = vmatpush1.msra.mxu0 %v768
    %770 = vmatprep.subr.mxu0 0.0
    %v771 = vand.u32 %v47, 4294901760
    %772 = vmatpush1.msra.mxu0 %v771
    %773 = vmatprep.subr.mxu0 0.0
    %v774 = vand.u32 %v48, 4294901760
    %775 = vmatpush1.msra.mxu0 %v774
    %776 = vmatprep.subr.mxu0 0.0
    %v777 = vand.u32 %v49, 4294901760
    %778 = vmatpush1.msra.mxu0 %v777
    %779 = vmatprep.subr.mxu0 0.0
    %v780 = vand.u32 %v50, 4294901760
    %781 = vmatpush1.msra.mxu0 %v780
    %782 = vmatprep.subr.mxu0 0.0
    %v783 = vand.u32 %v51, 4294901760
    %784 = vmatpush1.msra.mxu0 %v783
    %785 = vmatprep.subr.mxu0 0.0
    %v786 = vand.u32 %v52, 4294901760
    %787 = vmatpush1.msra.mxu0 %v786
    %788 = vmatprep.subr.mxu0 0.0
    %v789 = vand.u32 %v53, 4294901760
    %790 = vmatpush1.msra.mxu0 %v789
    %791 = vmatprep.subr.mxu0 0.0
    %v792 = vand.u32 %v54, 4294901760
    %793 = vmatpush1.msra.mxu0 %v792
    %v794 = vand.u32 %v169, 4294901760
    %v795 = vsub.f32 %v169, %v794
    %v796 = vand.u32 %v795, 4294901760
    %797 = vmatprep.mubr.f32.mxu0 %v796
    %v798 = vand.u32 %v168, 4294901760
    %v799 = vsub.f32 %v168, %v798
    %v800 = vand.u32 %v799, 4294901760
    %801 = vmatmul.mubr.f32.gmra.mrb[0].mxu0 %v800
    %v802 = vpop.f32.mrb[0].mxu0
    %v803 = vadd.f32 %v695, %v802
    %v804 = vpop.f32.mrb[0].mxu0
    %805 = vdwg.mxu0
    %806 = vmatprep.subr.mxu0 0.0
    %v807 = vand.u32 %v23, 4294901760
    %v808 = vsub.f32 %v23, %v807
    %v809 = vand.u32 %v808, 4294901760
    %810 = vmatpush1.msra.mxu0 %v809
    %811 = vmatprep.subr.mxu0 0.0
    %v812 = vand.u32 %v24, 4294901760
    %v813 = vsub.f32 %v24, %v812
    %v814 = vand.u32 %v813, 4294901760
    %815 = vmatpush1.msra.mxu0 %v814
    %816 = vmatprep.subr.mxu0 0.0
    %v817 = vand.u32 %v25, 4294901760
    %v818 = vsub.f32 %v25, %v817
    %v819 = vand.u32 %v818, 4294901760
    %820 = vmatpush1.msra.mxu0 %v819
    %821 = vmatprep.subr.mxu0 0.0
    %v822 = vand.u32 %v26, 4294901760
    %v823 = vsub.f32 %v26, %v822
    %v824 = vand.u32 %v823, 4294901760
    %825 = vmatpush1.msra.mxu0 %v824
    %826 = vmatprep.subr.mxu0 0.0
    %v827 = vand.u32 %v27, 4294901760
    %v828 = vsub.f32 %v27, %v827
    %v829 = vand.u32 %v828, 4294901760
    %830 = vmatpush1.msra.mxu0 %v829
    %831 = vmatprep.subr.mxu0 0.0
    %v832 = vand.u32 %v28, 4294901760
    %v833 = vsub.f32 %v28, %v832
    %v834 = vand.u32 %v833, 4294901760
    %835 = vmatpush1.msra.mxu0 %v834
    %836 = vmatprep.subr.mxu0 0.0
    %v837 = vand.u32 %v29, 4294901760
    %v838 = vsub.f32 %v29, %v837
    %v839 = vand.u32 %v838, 4294901760
    %840 = vmatpush1.msra.mxu0 %v839
    %841 = vmatprep.subr.mxu0 0.0
    %v842 = vand.u32 %v30, 4294901760
    %v843 = vsub.f32 %v30, %v842
    %v844 = vand.u32 %v843, 4294901760
    %845 = vmatpush1.msra.mxu0 %v844
    %846 = vmatprep.subr.mxu0 0.0
    %v847 = vand.u32 %v31, 4294901760
    %v848 = vsub.f32 %v31, %v847
    %v849 = vand.u32 %v848, 4294901760
    %850 = vmatpush1.msra.mxu0 %v849
    %851 = vmatprep.subr.mxu0 0.0
    %v852 = vand.u32 %v32, 4294901760
    %v853 = vsub.f32 %v32, %v852
    %v854 = vand.u32 %v853, 4294901760
    %855 = vmatpush1.msra.mxu0 %v854
    %856 = vmatprep.subr.mxu0 0.0
    %v857 = vand.u32 %v33, 4294901760
    %v858 = vsub.f32 %v33, %v857
    %v859 = vand.u32 %v858, 4294901760
    %860 = vmatpush1.msra.mxu0 %v859
    %861 = vmatprep.subr.mxu0 0.0
    %v862 = vand.u32 %v34, 4294901760
    %v863 = vsub.f32 %v34, %v862
    %v864 = vand.u32 %v863, 4294901760
    %865 = vmatpush1.msra.mxu0 %v864
    %866 = vmatprep.subr.mxu0 0.0
    %v867 = vand.u32 %v35, 4294901760
    %v868 = vsub.f32 %v35, %v867
    %v869 = vand.u32 %v868, 4294901760
    %870 = vmatpush1.msra.mxu0 %v869
    %871 = vmatprep.subr.mxu0 0.0
    %v872 = vand.u32 %v36, 4294901760
    %v873 = vsub.f32 %v36, %v872
    %v874 = vand.u32 %v873, 4294901760
    %875 = vmatpush1.msra.mxu0 %v874
    %876 = vmatprep.subr.mxu0 0.0
    %v877 = vand.u32 %v37, 4294901760
    %v878 = vsub.f32 %v37, %v877
    %v879 = vand.u32 %v878, 4294901760
    %880 = vmatpush1.msra.mxu0 %v879
    %881 = vmatprep.subr.mxu0 0.0
    %v882 = vand.u32 %v38, 4294901760
    %v883 = vsub.f32 %v38, %v882
    %v884 = vand.u32 %v883, 4294901760
    %885 = vmatpush1.msra.mxu0 %v884
    %886 = vmatprep.subr.mxu0 0.0
    %v887 = vand.u32 %v39, 4294901760
    %v888 = vsub.f32 %v39, %v887
    %v889 = vand.u32 %v888, 4294901760
    %890 = vmatpush1.msra.mxu0 %v889
    %891 = vmatprep.subr.mxu0 0.0
    %v892 = vand.u32 %v40, 4294901760
    %v893 = vsub.f32 %v40, %v892
    %v894 = vand.u32 %v893, 4294901760
    %895 = vmatpush1.msra.mxu0 %v894
    %896 = vmatprep.subr.mxu0 0.0
    %v897 = vand.u32 %v41, 4294901760
    %v898 = vsub.f32 %v41, %v897
    %v899 = vand.u32 %v898, 4294901760
    %900 = vmatpush1.msra.mxu0 %v899
    %901 = vmatprep.subr.mxu0 0.0
    %v902 = vand.u32 %v42, 4294901760
    %v903 = vsub.f32 %v42, %v902
    %v904 = vand.u32 %v903, 4294901760
    %905 = vmatpush1.msra.mxu0 %v904
    %906 = vmatprep.subr.mxu0 0.0
    %v907 = vand.u32 %v43, 4294901760
    %v908 = vsub.f32 %v43, %v907
    %v909 = vand.u32 %v908, 4294901760
    %910 = vmatpush1.msra.mxu0 %v909
    %911 = vmatprep.subr.mxu0 0.0
    %v912 = vand.u32 %v44, 4294901760
    %v913 = vsub.f32 %v44, %v912
    %v914 = vand.u32 %v913, 4294901760
    %915 = vmatpush1.msra.mxu0 %v914
    %916 = vmatprep.subr.mxu0 0.0
    %v917 = vand.u32 %v45, 4294901760
    %v918 = vsub.f32 %v45, %v917
    %v919 = vand.u32 %v918, 4294901760
    %920 = vmatpush1.msra.mxu0 %v919
    %921 = vmatprep.subr.mxu0 0.0
    %v922 = vand.u32 %v46, 4294901760
    %v923 = vsub.f32 %v46, %v922
    %v924 = vand.u32 %v923, 4294901760
    %925 = vmatpush1.msra.mxu0 %v924
    %926 = vmatprep.subr.mxu0 0.0
    %v927 = vand.u32 %v47, 4294901760
    %v928 = vsub.f32 %v47, %v927
    %v929 = vand.u32 %v928, 4294901760
    %930 = vmatpush1.msra.mxu0 %v929
    %931 = vmatprep.subr.mxu0 0.0
    %v932 = vand.u32 %v48, 4294901760
    %v933 = vsub.f32 %v48, %v932
    %v934 = vand.u32 %v933, 4294901760
    %935 = vmatpush1.msra.mxu0 %v934
    %936 = vmatprep.subr.mxu0 0.0
    %v937 = vand.u32 %v49, 4294901760
    %v938 = vsub.f32 %v49, %v937
    %v939 = vand.u32 %v938, 4294901760
    %940 = vmatpush1.msra.mxu0 %v939
    %941 = vmatprep.subr.mxu0 0.0
    %v942 = vand.u32 %v50, 4294901760
    %v943 = vsub.f32 %v50, %v942
    %v944 = vand.u32 %v943, 4294901760
    %945 = vmatpush1.msra.mxu0 %v944
    %946 = vmatprep.subr.mxu0 0.0
    %v947 = vand.u32 %v51, 4294901760
    %v948 = vsub.f32 %v51, %v947
    %v949 = vand.u32 %v948, 4294901760
    %950 = vmatpush1.msra.mxu0 %v949
    %951 = vmatprep.subr.mxu0 0.0
    %v952 = vand.u32 %v52, 4294901760
    %v953 = vsub.f32 %v52, %v952
    %v954 = vand.u32 %v953, 4294901760
    %955 = vmatpush1.msra.mxu0 %v954
    %956 = vmatprep.subr.mxu0 0.0
    %v957 = vand.u32 %v53, 4294901760
    %v958 = vsub.f32 %v53, %v957
    %v959 = vand.u32 %v958, 4294901760
    %960 = vmatpush1.msra.mxu0 %v959
    %961 = vmatprep.subr.mxu0 0.0
    %v962 = vand.u32 %v54, 4294901760
    %v963 = vsub.f32 %v54, %v962
    %v964 = vand.u32 %v963, 4294901760
    %965 = vmatpush1.msra.mxu0 %v964
    %v966 = vand.u32 %v169, 4294901760
    %967 = vmatprep.mubr.f32.mxu0 %v966
    %v968 = vand.u32 %v168, 4294901760
    %969 = vmatmul.mubr.f32.gmra.mrb[0].mxu0 %v968
    %v970 = vpop.f32.mrb[0].mxu0
    %v971 = vadd.f32 %v803, %v970
    %v972 = vpop.f32.mrb[0].mxu0
    %973 = vdwg.mxu0
    %974 = vmatprep.subr.mxu0 0.0
    %v975 = vand.u32 %v23, 4294901760
    %976 = vmatpush1.msra.mxu0 %v975
    %977 = vmatprep.subr.mxu0 0.0
    %v978 = vand.u32 %v24, 4294901760
    %979 = vmatpush1.msra.mxu0 %v978
    %980 = vmatprep.subr.mxu0 0.0
    %v981 = vand.u32 %v25, 4294901760
    %982 = vmatpush1.msra.mxu0 %v981
    %983 = vmatprep.subr.mxu0 0.0
    %v984 = vand.u32 %v26, 4294901760
    %985 = vmatpush1.msra.mxu0 %v984
    %986 = vmatprep.subr.mxu0 0.0
    %v987 = vand.u32 %v27, 4294901760
    %988 = vmatpush1.msra.mxu0 %v987
    %989 = vmatprep.subr.mxu0 0.0
    %v990 = vand.u32 %v28, 4294901760
    %991 = vmatpush1.msra.mxu0 %v990
    %992 = vmatprep.subr.mxu0 0.0
    %v993 = vand.u32 %v29, 4294901760
    %994 = vmatpush1.msra.mxu0 %v993
    %995 = vmatprep.subr.mxu0 0.0
    %v996 = vand.u32 %v30, 4294901760
    %997 = vmatpush1.msra.mxu0 %v996
    %998 = vmatprep.subr.mxu0 0.0
    %v999 = vand.u32 %v31, 4294901760
    %1000 = vmatpush1.msra.mxu0 %v999
    %1001 = vmatprep.subr.mxu0 0.0
    %v1002 = vand.u32 %v32, 4294901760
    %1003 = vmatpush1.msra.mxu0 %v1002
    %1004 = vmatprep.subr.mxu0 0.0
    %v1005 = vand.u32 %v33, 4294901760
    %1006 = vmatpush1.msra.mxu0 %v1005
    %1007 = vmatprep.subr.mxu0 0.0
    %v1008 = vand.u32 %v34, 4294901760
    %1009 = vmatpush1.msra.mxu0 %v1008
    %1010 = vmatprep.subr.mxu0 0.0
    %v1011 = vand.u32 %v35, 4294901760
    %1012 = vmatpush1.msra.mxu0 %v1011
    %1013 = vmatprep.subr.mxu0 0.0
    %v1014 = vand.u32 %v36, 4294901760
    %1015 = vmatpush1.msra.mxu0 %v1014
    %1016 = vmatprep.subr.mxu0 0.0
    %v1017 = vand.u32 %v37, 4294901760
    %1018 = vmatpush1.msra.mxu0 %v1017
    %1019 = vmatprep.subr.mxu0 0.0
    %v1020 = vand.u32 %v38, 4294901760
    %1021 = vmatpush1.msra.mxu0 %v1020
    %1022 = vmatprep.subr.mxu0 0.0
    %v1023 = vand.u32 %v39, 4294901760
    %1024 = vmatpush1.msra.mxu0 %v1023
    %1025 = vmatprep.subr.mxu0 0.0
    %v1026 = vand.u32 %v40, 4294901760
    %1027 = vmatpush1.msra.mxu0 %v1026
    %1028 = vmatprep.subr.mxu0 0.0
    %v1029 = vand.u32 %v41, 4294901760
    %1030 = vmatpush1.msra.mxu0 %v1029
    %1031 = vmatprep.subr.mxu0 0.0
    %v1032 = vand.u32 %v42, 4294901760
    %1033 = vmatpush1.msra.mxu0 %v1032
    %1034 = vmatprep.subr.mxu0 0.0
    %v1035 = vand.u32 %v43, 4294901760
    %1036 = vmatpush1.msra.mxu0 %v1035
    %1037 = vmatprep.subr.mxu0 0.0
    %v1038 = vand.u32 %v44, 4294901760
    %1039 = vmatpush1.msra.mxu0 %v1038
    %1040 = vmatprep.subr.mxu0 0.0
    %v1041 = vand.u32 %v45, 4294901760
    %1042 = vmatpush1.msra.mxu0 %v1041
    %1043 = vmatprep.subr.mxu0 0.0
    %v1044 = vand.u32 %v46, 4294901760
    %1045 = vmatpush1.msra.mxu0 %v1044
    %1046 = vmatprep.subr.mxu0 0.0
    %v1047 = vand.u32 %v47, 4294901760
    %1048 = vmatpush1.msra.mxu0 %v1047
    %1049 = vmatprep.subr.mxu0 0.0
    %v1050 = vand.u32 %v48, 4294901760
    %1051 = vmatpush1.msra.mxu0 %v1050
    %1052 = vmatprep.subr.mxu0 0.0
    %v1053 = vand.u32 %v49, 4294901760
    %1054 = vmatpush1.msra.mxu0 %v1053
    %1055 = vmatprep.subr.mxu0 0.0
    %v1056 = vand.u32 %v50, 4294901760
    %1057 = vmatpush1.msra.mxu0 %v1056
    %1058 = vmatprep.subr.mxu0 0.0
    %v1059 = vand.u32 %v51, 4294901760
    %1060 = vmatpush1.msra.mxu0 %v1059
    %1061 = vmatprep.subr.mxu0 0.0
    %v1062 = vand.u32 %v52, 4294901760
    %1063 = vmatpush1.msra.mxu0 %v1062
    %1064 = vmatprep.subr.mxu0 0.0
    %v1065 = vand.u32 %v53, 4294901760
    %1066 = vmatpush1.msra.mxu0 %v1065
    %1067 = vmatprep.subr.mxu0 0.0
    %v1068 = vand.u32 %v54, 4294901760
    %1069 = vmatpush1.msra.mxu0 %v1068
    %v1070 = vand.u32 %v169, 4294901760
    %1071 = vmatprep.mubr.f32.mxu0 %v1070
    %v1072 = vand.u32 %v168, 4294901760
    %1073 = vmatmul.mubr.f32.gmra.mrb[0].mxu0 %v1072
    %v1074 = vpop.f32.mrb[0].mxu0
    %v1075 = vadd.f32 %v971, %v1074
    %v1076 = vpop.f32.mrb[0].mxu0
    %1077 = vdwg.mxu0
    %1078 = vmatprep.subr.mxu0 0.0
    %v1079 = vand.u32 %v55, 4294901760
    %1080 = vmatpush1.msra.mxu0 %v1079
    %1081 = vmatprep.subr.mxu0 0.0
    %v1082 = vand.u32 %v56, 4294901760
    %1083 = vmatpush1.msra.mxu0 %v1082
    %1084 = vmatprep.subr.mxu0 0.0
    %v1085 = vand.u32 %v57, 4294901760
    %1086 = vmatpush1.msra.mxu0 %v1085
    %1087 = vmatprep.subr.mxu0 0.0
    %v1088 = vand.u32 %v58, 4294901760
    %1089 = vmatpush1.msra.mxu0 %v1088
    %1090 = vmatprep.subr.mxu0 0.0
    %v1091 = vand.u32 %v59, 4294901760
    %1092 = vmatpush1.msra.mxu0 %v1091
    %1093 = vmatprep.subr.mxu0 0.0
    %v1094 = vand.u32 %v60, 4294901760
    %1095 = vmatpush1.msra.mxu0 %v1094
    %1096 = vmatprep.subr.mxu0 0.0
    %v1097 = vand.u32 %v61, 4294901760
    %1098 = vmatpush1.msra.mxu0 %v1097
    %1099 = vmatprep.subr.mxu0 0.0
    %v1100 = vand.u32 %v62, 4294901760
    %1101 = vmatpush1.msra.mxu0 %v1100
    %1102 = vmatprep.subr.mxu0 0.0
    %v1103 = vand.u32 %v63, 4294901760
    %1104 = vmatpush1.msra.mxu0 %v1103
    %1105 = vmatprep.subr.mxu0 0.0
    %v1106 = vand.u32 %v64, 4294901760
    %1107 = vmatpush1.msra.mxu0 %v1106
    %1108 = vmatprep.subr.mxu0 0.0
    %v1109 = vand.u32 %v65, 4294901760
    %1110 = vmatpush1.msra.mxu0 %v1109
    %1111 = vmatprep.subr.mxu0 0.0
    %v1112 = vand.u32 %v66, 4294901760
    %1113 = vmatpush1.msra.mxu0 %v1112
    %1114 = vmatprep.subr.mxu0 0.0
    %v1115 = vand.u32 %v67, 4294901760
    %1116 = vmatpush1.msra.mxu0 %v1115
    %1117 = vmatprep.subr.mxu0 0.0
    %v1118 = vand.u32 %v68, 4294901760
    %1119 = vmatpush1.msra.mxu0 %v1118
    %1120 = vmatprep.subr.mxu0 0.0
    %v1121 = vand.u32 %v69, 4294901760
    %1122 = vmatpush1.msra.mxu0 %v1121
    %1123 = vmatprep.subr.mxu0 0.0
    %v1124 = vand.u32 %v70, 4294901760
    %1125 = vmatpush1.msra.mxu0 %v1124
    %1126 = vmatprep.subr.mxu0 0.0
    %v1127 = vand.u32 %v71, 4294901760
    %1128 = vmatpush1.msra.mxu0 %v1127
    %1129 = vmatprep.subr.mxu0 0.0
    %v1130 = vand.u32 %v72, 4294901760
    %1131 = vmatpush1.msra.mxu0 %v1130
    %1132 = vmatprep.subr.mxu0 0.0
    %v1133 = vand.u32 %v73, 4294901760
    %1134 = vmatpush1.msra.mxu0 %v1133
    %1135 = vmatprep.subr.mxu0 0.0
    %v1136 = vand.u32 %v74, 4294901760
    %1137 = vmatpush1.msra.mxu0 %v1136
    %1138 = vmatprep.subr.mxu0 0.0
    %v1139 = vand.u32 %v75, 4294901760
    %1140 = vmatpush1.msra.mxu0 %v1139
    %1141 = vmatprep.subr.mxu0 0.0
    %v1142 = vand.u32 %v76, 4294901760
    %1143 = vmatpush1.msra.mxu0 %v1142
    %1144 = vmatprep.subr.mxu0 0.0
    %v1145 = vand.u32 %v77, 4294901760
    %1146 = vmatpush1.msra.mxu0 %v1145
    %1147 = vmatprep.subr.mxu0 0.0
    %v1148 = vand.u32 %v78, 4294901760
    %1149 = vmatpush1.msra.mxu0 %v1148
    %1150 = vmatprep.subr.mxu0 0.0
    %v1151 = vand.u32 %v79, 4294901760
    %1152 = vmatpush1.msra.mxu0 %v1151
    %1153 = vmatprep.subr.mxu0 0.0
    %v1154 = vand.u32 %v80, 4294901760
    %1155 = vmatpush1.msra.mxu0 %v1154
    %1156 = vmatprep.subr.mxu0 0.0
    %v1157 = vand.u32 %v81, 4294901760
    %1158 = vmatpush1.msra.mxu0 %v1157
    %1159 = vmatprep.subr.mxu0 0.0
    %v1160 = vand.u32 %v82, 4294901760
    %1161 = vmatpush1.msra.mxu0 %v1160
    %1162 = vmatprep.subr.mxu0 0.0
    %v1163 = vand.u32 %v83, 4294901760
    %1164 = vmatpush1.msra.mxu0 %v1163
    %1165 = vmatprep.subr.mxu0 0.0
    %v1166 = vand.u32 %v84, 4294901760
    %1167 = vmatpush1.msra.mxu0 %v1166
    %1168 = vmatprep.subr.mxu0 0.0
    %v1169 = vand.u32 %v85, 4294901760
    %1170 = vmatpush1.msra.mxu0 %v1169
    %1171 = vmatprep.subr.mxu0 0.0
    %v1172 = vand.u32 %v86, 4294901760
    %1173 = vmatpush1.msra.mxu0 %v1172
    %v1174 = vand.u32 %v171, 4294901760
    %v1175 = vsub.f32 %v171, %v1174
    %v1176 = vand.u32 %v1175, 4294901760
    %v1177 = vsub.f32 %v1175, %v1176
    %v1178 = vand.u32 %v1177, 4294901760
    %1179 = vmatprep.mubr.f32.mxu0 %v1178
    %v1180 = vand.u32 %v170, 4294901760
    %v1181 = vsub.f32 %v170, %v1180
    %v1182 = vand.u32 %v1181, 4294901760
    %v1183 = vsub.f32 %v1181, %v1182
    %v1184 = vand.u32 %v1183, 4294901760
    %1185 = vmatmul.mubr.f32.gmra.mrb[0].mxu0 %v1184
    %v1186 = vpop.f32.mrb[0].mxu0
    %v1187 = vadd.f32 %v1075, %v1186
    %v1188 = vpop.f32.mrb[0].mxu0
    %1189 = vdwg.mxu0
    %1190 = vmatprep.subr.mxu0 0.0
    %v1191 = vand.u32 %v55, 4294901760
    %v1192 = vsub.f32 %v55, %v1191
    %v1193 = vand.u32 %v1192, 4294901760
    %v1194 = vsub.f32 %v1192, %v1193
    %v1195 = vand.u32 %v1194, 4294901760
    %1196 = vmatpush1.msra.mxu0 %v1195
    %1197 = vmatprep.subr.mxu0 0.0
    %v1198 = vand.u32 %v56, 4294901760
    %v1199 = vsub.f32 %v56, %v1198
    %v1200 = vand.u32 %v1199, 4294901760
    %v1201 = vsub.f32 %v1199, %v1200
    %v1202 = vand.u32 %v1201, 4294901760
    %1203 = vmatpush1.msra.mxu0 %v1202
    %1204 = vmatprep.subr.mxu0 0.0
    %v1205 = vand.u32 %v57, 4294901760
    %v1206 = vsub.f32 %v57, %v1205
    %v1207 = vand.u32 %v1206, 4294901760
    %v1208 = vsub.f32 %v1206, %v1207
    %v1209 = vand.u32 %v1208, 4294901760
    %1210 = vmatpush1.msra.mxu0 %v1209
    %1211 = vmatprep.subr.mxu0 0.0
    %v1212 = vand.u32 %v58, 4294901760
    %v1213 = vsub.f32 %v58, %v1212
    %v1214 = vand.u32 %v1213, 4294901760
    %v1215 = vsub.f32 %v1213, %v1214
    %v1216 = vand.u32 %v1215, 4294901760
    %1217 = vmatpush1.msra.mxu0 %v1216
    %1218 = vmatprep.subr.mxu0 0.0
    %v1219 = vand.u32 %v59, 4294901760
    %v1220 = vsub.f32 %v59, %v1219
    %v1221 = vand.u32 %v1220, 4294901760
    %v1222 = vsub.f32 %v1220, %v1221
    %v1223 = vand.u32 %v1222, 4294901760
    %1224 = vmatpush1.msra.mxu0 %v1223
    %1225 = vmatprep.subr.mxu0 0.0
    %v1226 = vand.u32 %v60, 4294901760
    %v1227 = vsub.f32 %v60, %v1226
    %v1228 = vand.u32 %v1227, 4294901760
    %v1229 = vsub.f32 %v1227, %v1228
    %v1230 = vand.u32 %v1229, 4294901760
    %1231 = vmatpush1.msra.mxu0 %v1230
    %1232 = vmatprep.subr.mxu0 0.0
    %v1233 = vand.u32 %v61, 4294901760
    %v1234 = vsub.f32 %v61, %v1233
    %v1235 = vand.u32 %v1234, 4294901760
    %v1236 = vsub.f32 %v1234, %v1235
    %v1237 = vand.u32 %v1236, 4294901760
    %1238 = vmatpush1.msra.mxu0 %v1237
    %1239 = vmatprep.subr.mxu0 0.0
    %v1240 = vand.u32 %v62, 4294901760
    %v1241 = vsub.f32 %v62, %v1240
    %v1242 = vand.u32 %v1241, 4294901760
    %v1243 = vsub.f32 %v1241, %v1242
    %v1244 = vand.u32 %v1243, 4294901760
    %1245 = vmatpush1.msra.mxu0 %v1244
    %1246 = vmatprep.subr.mxu0 0.0
    %v1247 = vand.u32 %v63, 4294901760
    %v1248 = vsub.f32 %v63, %v1247
    %v1249 = vand.u32 %v1248, 4294901760
    %v1250 = vsub.f32 %v1248, %v1249
    %v1251 = vand.u32 %v1250, 4294901760
    %1252 = vmatpush1.msra.mxu0 %v1251
    %1253 = vmatprep.subr.mxu0 0.0
    %v1254 = vand.u32 %v64, 4294901760
    %v1255 = vsub.f32 %v64, %v1254
    %v1256 = vand.u32 %v1255, 4294901760
    %v1257 = vsub.f32 %v1255, %v1256
    %v1258 = vand.u32 %v1257, 4294901760
    %1259 = vmatpush1.msra.mxu0 %v1258
    %1260 = vmatprep.subr.mxu0 0.0
    %v1261 = vand.u32 %v65, 4294901760
    %v1262 = vsub.f32 %v65, %v1261
    %v1263 = vand.u32 %v1262, 4294901760
    %v1264 = vsub.f32 %v1262, %v1263
    %v1265 = vand.u32 %v1264, 4294901760
    %1266 = vmatpush1.msra.mxu0 %v1265
    %1267 = vmatprep.subr.mxu0 0.0
    %v1268 = vand.u32 %v66, 4294901760
    %v1269 = vsub.f32 %v66, %v1268
    %v1270 = vand.u32 %v1269, 4294901760
    %v1271 = vsub.f32 %v1269, %v1270
    %v1272 = vand.u32 %v1271, 4294901760
    %1273 = vmatpush1.msra.mxu0 %v1272
    %1274 = vmatprep.subr.mxu0 0.0
    %v1275 = vand.u32 %v67, 4294901760
    %v1276 = vsub.f32 %v67, %v1275
    %v1277 = vand.u32 %v1276, 4294901760
    %v1278 = vsub.f32 %v1276, %v1277
    %v1279 = vand.u32 %v1278, 4294901760
    %1280 = vmatpush1.msra.mxu0 %v1279
    %1281 = vmatprep.subr.mxu0 0.0
    %v1282 = vand.u32 %v68, 4294901760
    %v1283 = vsub.f32 %v68, %v1282
    %v1284 = vand.u32 %v1283, 4294901760
    %v1285 = vsub.f32 %v1283, %v1284
    %v1286 = vand.u32 %v1285, 4294901760
    %1287 = vmatpush1.msra.mxu0 %v1286
    %1288 = vmatprep.subr.mxu0 0.0
    %v1289 = vand.u32 %v69, 4294901760
    %v1290 = vsub.f32 %v69, %v1289
    %v1291 = vand.u32 %v1290, 4294901760
    %v1292 = vsub.f32 %v1290, %v1291
    %v1293 = vand.u32 %v1292, 4294901760
    %1294 = vmatpush1.msra.mxu0 %v1293
    %1295 = vmatprep.subr.mxu0 0.0
    %v1296 = vand.u32 %v70, 4294901760
    %v1297 = vsub.f32 %v70, %v1296
    %v1298 = vand.u32 %v1297, 4294901760
    %v1299 = vsub.f32 %v1297, %v1298
    %v1300 = vand.u32 %v1299, 4294901760
    %1301 = vmatpush1.msra.mxu0 %v1300
    %1302 = vmatprep.subr.mxu0 0.0
    %v1303 = vand.u32 %v71, 4294901760
    %v1304 = vsub.f32 %v71, %v1303
    %v1305 = vand.u32 %v1304, 4294901760
    %v1306 = vsub.f32 %v1304, %v1305
    %v1307 = vand.u32 %v1306, 4294901760
    %1308 = vmatpush1.msra.mxu0 %v1307
    %1309 = vmatprep.subr.mxu0 0.0
    %v1310 = vand.u32 %v72, 4294901760
    %v1311 = vsub.f32 %v72, %v1310
    %v1312 = vand.u32 %v1311, 4294901760
    %v1313 = vsub.f32 %v1311, %v1312
    %v1314 = vand.u32 %v1313, 4294901760
    %1315 = vmatpush1.msra.mxu0 %v1314
    %1316 = vmatprep.subr.mxu0 0.0
    %v1317 = vand.u32 %v73, 4294901760
    %v1318 = vsub.f32 %v73, %v1317
    %v1319 = vand.u32 %v1318, 4294901760
    %v1320 = vsub.f32 %v1318, %v1319
    %v1321 = vand.u32 %v1320, 4294901760
    %1322 = vmatpush1.msra.mxu0 %v1321
    %1323 = vmatprep.subr.mxu0 0.0
    %v1324 = vand.u32 %v74, 4294901760
    %v1325 = vsub.f32 %v74, %v1324
    %v1326 = vand.u32 %v1325, 4294901760
    %v1327 = vsub.f32 %v1325, %v1326
    %v1328 = vand.u32 %v1327, 4294901760
    %1329 = vmatpush1.msra.mxu0 %v1328
    %1330 = vmatprep.subr.mxu0 0.0
    %v1331 = vand.u32 %v75, 4294901760
    %v1332 = vsub.f32 %v75, %v1331
    %v1333 = vand.u32 %v1332, 4294901760
    %v1334 = vsub.f32 %v1332, %v1333
    %v1335 = vand.u32 %v1334, 4294901760
    %1336 = vmatpush1.msra.mxu0 %v1335
    %1337 = vmatprep.subr.mxu0 0.0
    %v1338 = vand.u32 %v76, 4294901760
    %v1339 = vsub.f32 %v76, %v1338
    %v1340 = vand.u32 %v1339, 4294901760
    %v1341 = vsub.f32 %v1339, %v1340
    %v1342 = vand.u32 %v1341, 4294901760
    %1343 = vmatpush1.msra.mxu0 %v1342
    %1344 = vmatprep.subr.mxu0 0.0
    %v1345 = vand.u32 %v77, 4294901760
    %v1346 = vsub.f32 %v77, %v1345
    %v1347 = vand.u32 %v1346, 4294901760
    %v1348 = vsub.f32 %v1346, %v1347
    %v1349 = vand.u32 %v1348, 4294901760
    %1350 = vmatpush1.msra.mxu0 %v1349
    %1351 = vmatprep.subr.mxu0 0.0
    %v1352 = vand.u32 %v78, 4294901760
    %v1353 = vsub.f32 %v78, %v1352
    %v1354 = vand.u32 %v1353, 4294901760
    %v1355 = vsub.f32 %v1353, %v1354
    %v1356 = vand.u32 %v1355, 4294901760
    %1357 = vmatpush1.msra.mxu0 %v1356
    %1358 = vmatprep.subr.mxu0 0.0
    %v1359 = vand.u32 %v79, 4294901760
    %v1360 = vsub.f32 %v79, %v1359
    %v1361 = vand.u32 %v1360, 4294901760
    %v1362 = vsub.f32 %v1360, %v1361
    %v1363 = vand.u32 %v1362, 4294901760
    %1364 = vmatpush1.msra.mxu0 %v1363
    %1365 = vmatprep.subr.mxu0 0.0
    %v1366 = vand.u32 %v80, 4294901760
    %v1367 = vsub.f32 %v80, %v1366
    %v1368 = vand.u32 %v1367, 4294901760
    %v1369 = vsub.f32 %v1367, %v1368
    %v1370 = vand.u32 %v1369, 4294901760
    %1371 = vmatpush1.msra.mxu0 %v1370
    %1372 = vmatprep.subr.mxu0 0.0
    %v1373 = vand.u32 %v81, 4294901760
    %v1374 = vsub.f32 %v81, %v1373
    %v1375 = vand.u32 %v1374, 4294901760
    %v1376 = vsub.f32 %v1374, %v1375
    %v1377 = vand.u32 %v1376, 4294901760
    %1378 = vmatpush1.msra.mxu0 %v1377
    %1379 = vmatprep.subr.mxu0 0.0
    %v1380 = vand.u32 %v82, 4294901760
    %v1381 = vsub.f32 %v82, %v1380
    %v1382 = vand.u32 %v1381, 4294901760
    %v1383 = vsub.f32 %v1381, %v1382
    %v1384 = vand.u32 %v1383, 4294901760
    %1385 = vmatpush1.msra.mxu0 %v1384
    %1386 = vmatprep.subr.mxu0 0.0
    %v1387 = vand.u32 %v83, 4294901760
    %v1388 = vsub.f32 %v83, %v1387
    %v1389 = vand.u32 %v1388, 4294901760
    %v1390 = vsub.f32 %v1388, %v1389
    %v1391 = vand.u32 %v1390, 4294901760
    %1392 = vmatpush1.msra.mxu0 %v1391
    %1393 = vmatprep.subr.mxu0 0.0
    %v1394 = vand.u32 %v84, 4294901760
    %v1395 = vsub.f32 %v84, %v1394
    %v1396 = vand.u32 %v1395, 4294901760
    %v1397 = vsub.f32 %v1395, %v1396
    %v1398 = vand.u32 %v1397, 4294901760
    %1399 = vmatpush1.msra.mxu0 %v1398
    %1400 = vmatprep.subr.mxu0 0.0
    %v1401 = vand.u32 %v85, 4294901760
    %v1402 = vsub.f32 %v85, %v1401
    %v1403 = vand.u32 %v1402, 4294901760
    %v1404 = vsub.f32 %v1402, %v1403
    %v1405 = vand.u32 %v1404, 4294901760
    %1406 = vmatpush1.msra.mxu0 %v1405
    %1407 = vmatprep.subr.mxu0 0.0
    %v1408 = vand.u32 %v86, 4294901760
    %v1409 = vsub.f32 %v86, %v1408
    %v1410 = vand.u32 %v1409, 4294901760
    %v1411 = vsub.f32 %v1409, %v1410
    %v1412 = vand.u32 %v1411, 4294901760
    %1413 = vmatpush1.msra.mxu0 %v1412
    %v1414 = vand.u32 %v171, 4294901760
    %1415 = vmatprep.mubr.f32.mxu0 %v1414
    %v1416 = vand.u32 %v170, 4294901760
    %1417 = vmatmul.mubr.f32.gmra.mrb[0].mxu0 %v1416
    %v1418 = vpop.f32.mrb[0].mxu0
    %v1419 = vadd.f32 %v1187, %v1418
    %v1420 = vpop.f32.mrb[0].mxu0
    %1421 = vdwg.mxu0
    %1422 = vmatprep.subr.mxu0 0.0
    %v1423 = vand.u32 %v55, 4294901760
    %v1424 = vsub.f32 %v55, %v1423
    %1425 = vmatpush1.msra.mxu0 %v1424
    %1426 = vmatprep.subr.mxu0 0.0
    %v1427 = vand.u32 %v56, 4294901760
    %v1428 = vsub.f32 %v56, %v1427
    %1429 = vmatpush1.msra.mxu0 %v1428
    %1430 = vmatprep.subr.mxu0 0.0
    %v1431 = vand.u32 %v57, 4294901760
    %v1432 = vsub.f32 %v57, %v1431
    %1433 = vmatpush1.msra.mxu0 %v1432
    %1434 = vmatprep.subr.mxu0 0.0
    %v1435 = vand.u32 %v58, 4294901760
    %v1436 = vsub.f32 %v58, %v1435
    %1437 = vmatpush1.msra.mxu0 %v1436
    %1438 = vmatprep.subr.mxu0 0.0
    %v1439 = vand.u32 %v59, 4294901760
    %v1440 = vsub.f32 %v59, %v1439
    %1441 = vmatpush1.msra.mxu0 %v1440
    %1442 = vmatprep.subr.mxu0 0.0
    %v1443 = vand.u32 %v60, 4294901760
    %v1444 = vsub.f32 %v60, %v1443
    %1445 = vmatpush1.msra.mxu0 %v1444
    %1446 = vmatprep.subr.mxu0 0.0
    %v1447 = vand.u32 %v61, 4294901760
    %v1448 = vsub.f32 %v61, %v1447
    %1449 = vmatpush1.msra.mxu0 %v1448
    %1450 = vmatprep.subr.mxu0 0.0
    %v1451 = vand.u32 %v62, 4294901760
    %v1452 = vsub.f32 %v62, %v1451
    %1453 = vmatpush1.msra.mxu0 %v1452
    %1454 = vmatprep.subr.mxu0 0.0
    %v1455 = vand.u32 %v63, 4294901760
    %v1456 = vsub.f32 %v63, %v1455
    %1457 = vmatpush1.msra.mxu0 %v1456
    %1458 = vmatprep.subr.mxu0 0.0
    %v1459 = vand.u32 %v64, 4294901760
    %v1460 = vsub.f32 %v64, %v1459
    %1461 = vmatpush1.msra.mxu0 %v1460
    %1462 = vmatprep.subr.mxu0 0.0
    %v1463 = vand.u32 %v65, 4294901760
    %v1464 = vsub.f32 %v65, %v1463
    %1465 = vmatpush1.msra.mxu0 %v1464
    %1466 = vmatprep.subr.mxu0 0.0
    %v1467 = vand.u32 %v66, 4294901760
    %v1468 = vsub.f32 %v66, %v1467
    %1469 = vmatpush1.msra.mxu0 %v1468
    %1470 = vmatprep.subr.mxu0 0.0
    %v1471 = vand.u32 %v67, 4294901760
    %v1472 = vsub.f32 %v67, %v1471
    %1473 = vmatpush1.msra.mxu0 %v1472
    %1474 = vmatprep.subr.mxu0 0.0
    %v1475 = vand.u32 %v68, 4294901760
    %v1476 = vsub.f32 %v68, %v1475
    %1477 = vmatpush1.msra.mxu0 %v1476
    %1478 = vmatprep.subr.mxu0 0.0
    %v1479 = vand.u32 %v69, 4294901760
    %v1480 = vsub.f32 %v69, %v1479
    %1481 = vmatpush1.msra.mxu0 %v1480
    %1482 = vmatprep.subr.mxu0 0.0
    %v1483 = vand.u32 %v70, 4294901760
    %v1484 = vsub.f32 %v70, %v1483
    %1485 = vmatpush1.msra.mxu0 %v1484
    %1486 = vmatprep.subr.mxu0 0.0
    %v1487 = vand.u32 %v71, 4294901760
    %v1488 = vsub.f32 %v71, %v1487
    %1489 = vmatpush1.msra.mxu0 %v1488
    %1490 = vmatprep.subr.mxu0 0.0
    %v1491 = vand.u32 %v72, 4294901760
    %v1492 = vsub.f32 %v72, %v1491
    %1493 = vmatpush1.msra.mxu0 %v1492
    %1494 = vmatprep.subr.mxu0 0.0
    %v1495 = vand.u32 %v73, 4294901760
    %v1496 = vsub.f32 %v73, %v1495
    %1497 = vmatpush1.msra.mxu0 %v1496
    %1498 = vmatprep.subr.mxu0 0.0
    %v1499 = vand.u32 %v74, 4294901760
    %v1500 = vsub.f32 %v74, %v1499
    %1501 = vmatpush1.msra.mxu0 %v1500
    %1502 = vmatprep.subr.mxu0 0.0
    %v1503 = vand.u32 %v75, 4294901760
    %v1504 = vsub.f32 %v75, %v1503
    %1505 = vmatpush1.msra.mxu0 %v1504
    %1506 = vmatprep.subr.mxu0 0.0
    %v1507 = vand.u32 %v76, 4294901760
    %v1508 = vsub.f32 %v76, %v1507
    %1509 = vmatpush1.msra.mxu0 %v1508
    %1510 = vmatprep.subr.mxu0 0.0
    %v1511 = vand.u32 %v77, 4294901760
    %v1512 = vsub.f32 %v77, %v1511
    %1513 = vmatpush1.msra.mxu0 %v1512
    %1514 = vmatprep.subr.mxu0 0.0
    %v1515 = vand.u32 %v78, 4294901760
    %v1516 = vsub.f32 %v78, %v1515
    %1517 = vmatpush1.msra.mxu0 %v1516
    %1518 = vmatprep.subr.mxu0 0.0
    %v1519 = vand.u32 %v79, 4294901760
    %v1520 = vsub.f32 %v79, %v1519
    %1521 = vmatpush1.msra.mxu0 %v1520
    %1522 = vmatprep.subr.mxu0 0.0
    %v1523 = vand.u32 %v80, 4294901760
    %v1524 = vsub.f32 %v80, %v1523
    %1525 = vmatpush1.msra.mxu0 %v1524
    %1526 = vmatprep.subr.mxu0 0.0
    %v1527 = vand.u32 %v81, 4294901760
    %v1528 = vsub.f32 %v81, %v1527
    %1529 = vmatpush1.msra.mxu0 %v1528
    %1530 = vmatprep.subr.mxu0 0.0
    %v1531 = vand.u32 %v82, 4294901760
    %v1532 = vsub.f32 %v82, %v1531
    %1533 = vmatpush1.msra.mxu0 %v1532
    %1534 = vmatprep.subr.mxu0 0.0
    %v1535 = vand.u32 %v83, 4294901760
    %v1536 = vsub.f32 %v83, %v1535
    %1537 = vmatpush1.msra.mxu0 %v1536
    %1538 = vmatprep.subr.mxu0 0.0
    %v1539 = vand.u32 %v84, 4294901760
    %v1540 = vsub.f32 %v84, %v1539
    %1541 = vmatpush1.msra.mxu0 %v1540
    %1542 = vmatprep.subr.mxu0 0.0
    %v1543 = vand.u32 %v85, 4294901760
    %v1544 = vsub.f32 %v85, %v1543
    %1545 = vmatpush1.msra.mxu0 %v1544
    %1546 = vmatprep.subr.mxu0 0.0
    %v1547 = vand.u32 %v86, 4294901760
    %v1548 = vsub.f32 %v86, %v1547
    %1549 = vmatpush1.msra.mxu0 %v1548
    %v1550 = vand.u32 %v171, 4294901760
    %v1551 = vsub.f32 %v171, %v1550
    %1552 = vmatprep.mubr.f32.mxu0 %v1551
    %v1553 = vand.u32 %v170, 4294901760
    %v1554 = vsub.f32 %v170, %v1553
    %1555 = vmatmul.mubr.f32.gmra.mrb[0].mxu0 %v1554
    %v1556 = vpop.f32.mrb[0].mxu0
    %v1557 = vadd.f32 %v1419, %v1556
    %v1558 = vpop.f32.mrb[0].mxu0
    %1559 = vdwg.mxu0
    %1560 = vmatprep.subr.mxu0 0.0
    %v1561 = vand.u32 %v55, 4294901760
    %1562 = vmatpush1.msra.mxu0 %v1561
    %1563 = vmatprep.subr.mxu0 0.0
    %v1564 = vand.u32 %v56, 4294901760
    %1565 = vmatpush1.msra.mxu0 %v1564
    %1566 = vmatprep.subr.mxu0 0.0
    %v1567 = vand.u32 %v57, 4294901760
    %1568 = vmatpush1.msra.mxu0 %v1567
    %1569 = vmatprep.subr.mxu0 0.0
    %v1570 = vand.u32 %v58, 4294901760
    %1571 = vmatpush1.msra.mxu0 %v1570
    %1572 = vmatprep.subr.mxu0 0.0
    %v1573 = vand.u32 %v59, 4294901760
    %1574 = vmatpush1.msra.mxu0 %v1573
    %1575 = vmatprep.subr.mxu0 0.0
    %v1576 = vand.u32 %v60, 4294901760
    %1577 = vmatpush1.msra.mxu0 %v1576
    %1578 = vmatprep.subr.mxu0 0.0
    %v1579 = vand.u32 %v61, 4294901760
    %1580 = vmatpush1.msra.mxu0 %v1579
    %1581 = vmatprep.subr.mxu0 0.0
    %v1582 = vand.u32 %v62, 4294901760
    %1583 = vmatpush1.msra.mxu0 %v1582
    %1584 = vmatprep.subr.mxu0 0.0
    %v1585 = vand.u32 %v63, 4294901760
    %1586 = vmatpush1.msra.mxu0 %v1585
    %1587 = vmatprep.subr.mxu0 0.0
    %v1588 = vand.u32 %v64, 4294901760
    %1589 = vmatpush1.msra.mxu0 %v1588
    %1590 = vmatprep.subr.mxu0 0.0
    %v1591 = vand.u32 %v65, 4294901760
    %1592 = vmatpush1.msra.mxu0 %v1591
    %1593 = vmatprep.subr.mxu0 0.0
    %v1594 = vand.u32 %v66, 4294901760
    %1595 = vmatpush1.msra.mxu0 %v1594
    %1596 = vmatprep.subr.mxu0 0.0
    %v1597 = vand.u32 %v67, 4294901760
    %1598 = vmatpush1.msra.mxu0 %v1597
    %1599 = vmatprep.subr.mxu0 0.0
    %v1600 = vand.u32 %v68, 4294901760
    %1601 = vmatpush1.msra.mxu0 %v1600
    %1602 = vmatprep.subr.mxu0 0.0
    %v1603 = vand.u32 %v69, 4294901760
    %1604 = vmatpush1.msra.mxu0 %v1603
    %1605 = vmatprep.subr.mxu0 0.0
    %v1606 = vand.u32 %v70, 4294901760
    %1607 = vmatpush1.msra.mxu0 %v1606
    %1608 = vmatprep.subr.mxu0 0.0
    %v1609 = vand.u32 %v71, 4294901760
    %1610 = vmatpush1.msra.mxu0 %v1609
    %1611 = vmatprep.subr.mxu0 0.0
    %v1612 = vand.u32 %v72, 4294901760
    %1613 = vmatpush1.msra.mxu0 %v1612
    %1614 = vmatprep.subr.mxu0 0.0
    %v1615 = vand.u32 %v73, 4294901760
    %1616 = vmatpush1.msra.mxu0 %v1615
    %1617 = vmatprep.subr.mxu0 0.0
    %v1618 = vand.u32 %v74, 4294901760
    %1619 = vmatpush1.msra.mxu0 %v1618
    %1620 = vmatprep.subr.mxu0 0.0
    %v1621 = vand.u32 %v75, 4294901760
    %1622 = vmatpush1.msra.mxu0 %v1621
    %1623 = vmatprep.subr.mxu0 0.0
    %v1624 = vand.u32 %v76, 4294901760
    %1625 = vmatpush1.msra.mxu0 %v1624
    %1626 = vmatprep.subr.mxu0 0.0
    %v1627 = vand.u32 %v77, 4294901760
    %1628 = vmatpush1.msra.mxu0 %v1627
    %1629 = vmatprep.subr.mxu0 0.0
    %v1630 = vand.u32 %v78, 4294901760
    %1631 = vmatpush1.msra.mxu0 %v1630
    %1632 = vmatprep.subr.mxu0 0.0
    %v1633 = vand.u32 %v79, 4294901760
    %1634 = vmatpush1.msra.mxu0 %v1633
    %1635 = vmatprep.subr.mxu0 0.0
    %v1636 = vand.u32 %v80, 4294901760
    %1637 = vmatpush1.msra.mxu0 %v1636
    %1638 = vmatprep.subr.mxu0 0.0
    %v1639 = vand.u32 %v81, 4294901760
    %1640 = vmatpush1.msra.mxu0 %v1639
    %1641 = vmatprep.subr.mxu0 0.0
    %v1642 = vand.u32 %v82, 4294901760
    %1643 = vmatpush1.msra.mxu0 %v1642
    %1644 = vmatprep.subr.mxu0 0.0
    %v1645 = vand.u32 %v83, 4294901760
    %1646 = vmatpush1.msra.mxu0 %v1645
    %1647 = vmatprep.subr.mxu0 0.0
    %v1648 = vand.u32 %v84, 4294901760
    %1649 = vmatpush1.msra.mxu0 %v1648
    %1650 = vmatprep.subr.mxu0 0.0
    %v1651 = vand.u32 %v85, 4294901760
    %1652 = vmatpush1.msra.mxu0 %v1651
    %1653 = vmatprep.subr.mxu0 0.0
    %v1654 = vand.u32 %v86, 4294901760
    %1655 = vmatpush1.msra.mxu0 %v1654
    %v1656 = vand.u32 %v171, 4294901760
    %v1657 = vsub.f32 %v171, %v1656
    %v1658 = vand.u32 %v1657, 4294901760
    %1659 = vmatprep.mubr.f32.mxu0 %v1658
    %v1660 = vand.u32 %v170, 4294901760
    %v1661 = vsub.f32 %v170, %v1660
    %v1662 = vand.u32 %v1661, 4294901760
    %1663 = vmatmul.mubr.f32.gmra.mrb[0].mxu0 %v1662
    %v1664 = vpop.f32.mrb[0].mxu0
    %v1665 = vadd.f32 %v1557, %v1664
    %v1666 = vpop.f32.mrb[0].mxu0
    %1667 = vdwg.mxu0
    %1668 = vmatprep.subr.mxu0 0.0
    %v1669 = vand.u32 %v55, 4294901760
    %v1670 = vsub.f32 %v55, %v1669
    %v1671 = vand.u32 %v1670, 4294901760
    %1672 = vmatpush1.msra.mxu0 %v1671
    %1673 = vmatprep.subr.mxu0 0.0
    %v1674 = vand.u32 %v56, 4294901760
    %v1675 = vsub.f32 %v56, %v1674
    %v1676 = vand.u32 %v1675, 4294901760
    %1677 = vmatpush1.msra.mxu0 %v1676
    %1678 = vmatprep.subr.mxu0 0.0
    %v1679 = vand.u32 %v57, 4294901760
    %v1680 = vsub.f32 %v57, %v1679
    %v1681 = vand.u32 %v1680, 4294901760
    %1682 = vmatpush1.msra.mxu0 %v1681
    %1683 = vmatprep.subr.mxu0 0.0
    %v1684 = vand.u32 %v58, 4294901760
    %v1685 = vsub.f32 %v58, %v1684
    %v1686 = vand.u32 %v1685, 4294901760
    %1687 = vmatpush1.msra.mxu0 %v1686
    %1688 = vmatprep.subr.mxu0 0.0
    %v1689 = vand.u32 %v59, 4294901760
    %v1690 = vsub.f32 %v59, %v1689
    %v1691 = vand.u32 %v1690, 4294901760
    %1692 = vmatpush1.msra.mxu0 %v1691
    %1693 = vmatprep.subr.mxu0 0.0
    %v1694 = vand.u32 %v60, 4294901760
    %v1695 = vsub.f32 %v60, %v1694
    %v1696 = vand.u32 %v1695, 4294901760
    %1697 = vmatpush1.msra.mxu0 %v1696
    %1698 = vmatprep.subr.mxu0 0.0
    %v1699 = vand.u32 %v61, 4294901760
    %v1700 = vsub.f32 %v61, %v1699
    %v1701 = vand.u32 %v1700, 4294901760
    %1702 = vmatpush1.msra.mxu0 %v1701
    %1703 = vmatprep.subr.mxu0 0.0
    %v1704 = vand.u32 %v62, 4294901760
    %v1705 = vsub.f32 %v62, %v1704
    %v1706 = vand.u32 %v1705, 4294901760
    %1707 = vmatpush1.msra.mxu0 %v1706
    %1708 = vmatprep.subr.mxu0 0.0
    %v1709 = vand.u32 %v63, 4294901760
    %v1710 = vsub.f32 %v63, %v1709
    %v1711 = vand.u32 %v1710, 4294901760
    %1712 = vmatpush1.msra.mxu0 %v1711
    %1713 = vmatprep.subr.mxu0 0.0
    %v1714 = vand.u32 %v64, 4294901760
    %v1715 = vsub.f32 %v64, %v1714
    %v1716 = vand.u32 %v1715, 4294901760
    %1717 = vmatpush1.msra.mxu0 %v1716
    %1718 = vmatprep.subr.mxu0 0.0
    %v1719 = vand.u32 %v65, 4294901760
    %v1720 = vsub.f32 %v65, %v1719
    %v1721 = vand.u32 %v1720, 4294901760
    %1722 = vmatpush1.msra.mxu0 %v1721
    %1723 = vmatprep.subr.mxu0 0.0
    %v1724 = vand.u32 %v66, 4294901760
    %v1725 = vsub.f32 %v66, %v1724
    %v1726 = vand.u32 %v1725, 4294901760
    %1727 = vmatpush1.msra.mxu0 %v1726
    %1728 = vmatprep.subr.mxu0 0.0
    %v1729 = vand.u32 %v67, 4294901760
    %v1730 = vsub.f32 %v67, %v1729
    %v1731 = vand.u32 %v1730, 4294901760
    %1732 = vmatpush1.msra.mxu0 %v1731
    %1733 = vmatprep.subr.mxu0 0.0
    %v1734 = vand.u32 %v68, 4294901760
    %v1735 = vsub.f32 %v68, %v1734
    %v1736 = vand.u32 %v1735, 4294901760
    %1737 = vmatpush1.msra.mxu0 %v1736
    %1738 = vmatprep.subr.mxu0 0.0
    %v1739 = vand.u32 %v69, 4294901760
    %v1740 = vsub.f32 %v69, %v1739
    %v1741 = vand.u32 %v1740, 4294901760
    %1742 = vmatpush1.msra.mxu0 %v1741
    %1743 = vmatprep.subr.mxu0 0.0
    %v1744 = vand.u32 %v70, 4294901760
    %v1745 = vsub.f32 %v70, %v1744
    %v1746 = vand.u32 %v1745, 4294901760
    %1747 = vmatpush1.msra.mxu0 %v1746
    %1748 = vmatprep.subr.mxu0 0.0
    %v1749 = vand.u32 %v71, 4294901760
    %v1750 = vsub.f32 %v71, %v1749
    %v1751 = vand.u32 %v1750, 4294901760
    %1752 = vmatpush1.msra.mxu0 %v1751
    %1753 = vmatprep.subr.mxu0 0.0
    %v1754 = vand.u32 %v72, 4294901760
    %v1755 = vsub.f32 %v72, %v1754
    %v1756 = vand.u32 %v1755, 4294901760
    %1757 = vmatpush1.msra.mxu0 %v1756
    %1758 = vmatprep.subr.mxu0 0.0
    %v1759 = vand.u32 %v73, 4294901760
    %v1760 = vsub.f32 %v73, %v1759
    %v1761 = vand.u32 %v1760, 4294901760
    %1762 = vmatpush1.msra.mxu0 %v1761
    %1763 = vmatprep.subr.mxu0 0.0
    %v1764 = vand.u32 %v74, 4294901760
    %v1765 = vsub.f32 %v74, %v1764
    %v1766 = vand.u32 %v1765, 4294901760
    %1767 = vmatpush1.msra.mxu0 %v1766
    %1768 = vmatprep.subr.mxu0 0.0
    %v1769 = vand.u32 %v75, 4294901760
    %v1770 = vsub.f32 %v75, %v1769
    %v1771 = vand.u32 %v1770, 4294901760
    %1772 = vmatpush1.msra.mxu0 %v1771
    %1773 = vmatprep.subr.mxu0 0.0
    %v1774 = vand.u32 %v76, 4294901760
    %v1775 = vsub.f32 %v76, %v1774
    %v1776 = vand.u32 %v1775, 4294901760
    %1777 = vmatpush1.msra.mxu0 %v1776
    %1778 = vmatprep.subr.mxu0 0.0
    %v1779 = vand.u32 %v77, 4294901760
    %v1780 = vsub.f32 %v77, %v1779
    %v1781 = vand.u32 %v1780, 4294901760
    %1782 = vmatpush1.msra.mxu0 %v1781
    %1783 = vmatprep.subr.mxu0 0.0
    %v1784 = vand.u32 %v78, 4294901760
    %v1785 = vsub.f32 %v78, %v1784
    %v1786 = vand.u32 %v1785, 4294901760
    %1787 = vmatpush1.msra.mxu0 %v1786
    %1788 = vmatprep.subr.mxu0 0.0
    %v1789 = vand.u32 %v79, 4294901760
    %v1790 = vsub.f32 %v79, %v1789
    %v1791 = vand.u32 %v1790, 4294901760
    %1792 = vmatpush1.msra.mxu0 %v1791
    %1793 = vmatprep.subr.mxu0 0.0
    %v1794 = vand.u32 %v80, 4294901760
    %v1795 = vsub.f32 %v80, %v1794
    %v1796 = vand.u32 %v1795, 4294901760
    %1797 = vmatpush1.msra.mxu0 %v1796
    %1798 = vmatprep.subr.mxu0 0.0
    %v1799 = vand.u32 %v81, 4294901760
    %v1800 = vsub.f32 %v81, %v1799
    %v1801 = vand.u32 %v1800, 4294901760
    %1802 = vmatpush1.msra.mxu0 %v1801
    %1803 = vmatprep.subr.mxu0 0.0
    %v1804 = vand.u32 %v82, 4294901760
    %v1805 = vsub.f32 %v82, %v1804
    %v1806 = vand.u32 %v1805, 4294901760
    %1807 = vmatpush1.msra.mxu0 %v1806
    %1808 = vmatprep.subr.mxu0 0.0
    %v1809 = vand.u32 %v83, 4294901760
    %v1810 = vsub.f32 %v83, %v1809
    %v1811 = vand.u32 %v1810, 4294901760
    %1812 = vmatpush1.msra.mxu0 %v1811
    %1813 = vmatprep.subr.mxu0 0.0
    %v1814 = vand.u32 %v84, 4294901760
    %v1815 = vsub.f32 %v84, %v1814
    %v1816 = vand.u32 %v1815, 4294901760
    %1817 = vmatpush1.msra.mxu0 %v1816
    %1818 = vmatprep.subr.mxu0 0.0
    %v1819 = vand.u32 %v85, 4294901760
    %v1820 = vsub.f32 %v85, %v1819
    %v1821 = vand.u32 %v1820, 4294901760
    %1822 = vmatpush1.msra.mxu0 %v1821
    %1823 = vmatprep.subr.mxu0 0.0
    %v1824 = vand.u32 %v86, 4294901760
    %v1825 = vsub.f32 %v86, %v1824
    %v1826 = vand.u32 %v1825, 4294901760
    %1827 = vmatpush1.msra.mxu0 %v1826
    %v1828 = vand.u32 %v171, 4294901760
    %1829 = vmatprep.mubr.f32.mxu0 %v1828
    %v1830 = vand.u32 %v170, 4294901760
    %1831 = vmatmul.mubr.f32.gmra.mrb[0].mxu0 %v1830
    %v1832 = vpop.f32.mrb[0].mxu0
    %v1833 = vadd.f32 %v1665, %v1832
    %v1834 = vpop.f32.mrb[0].mxu0
    %1835 = vdwg.mxu0
    %1836 = vmatprep.subr.mxu0 0.0
    %v1837 = vand.u32 %v55, 4294901760
    %1838 = vmatpush1.msra.mxu0 %v1837
    %1839 = vmatprep.subr.mxu0 0.0
    %v1840 = vand.u32 %v56, 4294901760
    %1841 = vmatpush1.msra.mxu0 %v1840
    %1842 = vmatprep.subr.mxu0 0.0
    %v1843 = vand.u32 %v57, 4294901760
    %1844 = vmatpush1.msra.mxu0 %v1843
    %1845 = vmatprep.subr.mxu0 0.0
    %v1846 = vand.u32 %v58, 4294901760
    %1847 = vmatpush1.msra.mxu0 %v1846
    %1848 = vmatprep.subr.mxu0 0.0
    %v1849 = vand.u32 %v59, 4294901760
    %1850 = vmatpush1.msra.mxu0 %v1849
    %1851 = vmatprep.subr.mxu0 0.0
    %v1852 = vand.u32 %v60, 4294901760
    %1853 = vmatpush1.msra.mxu0 %v1852
    %1854 = vmatprep.subr.mxu0 0.0
    %v1855 = vand.u32 %v61, 4294901760
    %1856 = vmatpush1.msra.mxu0 %v1855
    %1857 = vmatprep.subr.mxu0 0.0
    %v1858 = vand.u32 %v62, 4294901760
    %1859 = vmatpush1.msra.mxu0 %v1858
    %1860 = vmatprep.subr.mxu0 0.0
    %v1861 = vand.u32 %v63, 4294901760
    %1862 = vmatpush1.msra.mxu0 %v1861
    %1863 = vmatprep.subr.mxu0 0.0
    %v1864 = vand.u32 %v64, 4294901760
    %1865 = vmatpush1.msra.mxu0 %v1864
    %1866 = vmatprep.subr.mxu0 0.0
    %v1867 = vand.u32 %v65, 4294901760
    %1868 = vmatpush1.msra.mxu0 %v1867
    %1869 = vmatprep.subr.mxu0 0.0
    %v1870 = vand.u32 %v66, 4294901760
    %1871 = vmatpush1.msra.mxu0 %v1870
    %1872 = vmatprep.subr.mxu0 0.0
    %v1873 = vand.u32 %v67, 4294901760
    %1874 = vmatpush1.msra.mxu0 %v1873
    %1875 = vmatprep.subr.mxu0 0.0
    %v1876 = vand.u32 %v68, 4294901760
    %1877 = vmatpush1.msra.mxu0 %v1876
    %1878 = vmatprep.subr.mxu0 0.0
    %v1879 = vand.u32 %v69, 4294901760
    %1880 = vmatpush1.msra.mxu0 %v1879
    %1881 = vmatprep.subr.mxu0 0.0
    %v1882 = vand.u32 %v70, 4294901760
    %1883 = vmatpush1.msra.mxu0 %v1882
    %1884 = vmatprep.subr.mxu0 0.0
    %v1885 = vand.u32 %v71, 4294901760
    %1886 = vmatpush1.msra.mxu0 %v1885
    %1887 = vmatprep.subr.mxu0 0.0
    %v1888 = vand.u32 %v72, 4294901760
    %1889 = vmatpush1.msra.mxu0 %v1888
    %1890 = vmatprep.subr.mxu0 0.0
    %v1891 = vand.u32 %v73, 4294901760
    %1892 = vmatpush1.msra.mxu0 %v1891
    %1893 = vmatprep.subr.mxu0 0.0
    %v1894 = vand.u32 %v74, 4294901760
    %1895 = vmatpush1.msra.mxu0 %v1894
    %1896 = vmatprep.subr.mxu0 0.0
    %v1897 = vand.u32 %v75, 4294901760
    %1898 = vmatpush1.msra.mxu0 %v1897
    %1899 = vmatprep.subr.mxu0 0.0
    %v1900 = vand.u32 %v76, 4294901760
    %1901 = vmatpush1.msra.mxu0 %v1900
    %1902 = vmatprep.subr.mxu0 0.0
    %v1903 = vand.u32 %v77, 4294901760
    %1904 = vmatpush1.msra.mxu0 %v1903
    %1905 = vmatprep.subr.mxu0 0.0
    %v1906 = vand.u32 %v78, 4294901760
    %1907 = vmatpush1.msra.mxu0 %v1906
    %1908 = vmatprep.subr.mxu0 0.0
    %v1909 = vand.u32 %v79, 4294901760
    %1910 = vmatpush1.msra.mxu0 %v1909
    %1911 = vmatprep.subr.mxu0 0.0
    %v1912 = vand.u32 %v80, 4294901760
    %1913 = vmatpush1.msra.mxu0 %v1912
    %1914 = vmatprep.subr.mxu0 0.0
    %v1915 = vand.u32 %v81, 4294901760
    %1916 = vmatpush1.msra.mxu0 %v1915
    %1917 = vmatprep.subr.mxu0 0.0
    %v1918 = vand.u32 %v82, 4294901760
    %1919 = vmatpush1.msra.mxu0 %v1918
    %1920 = vmatprep.subr.mxu0 0.0
    %v1921 = vand.u32 %v83, 4294901760
    %1922 = vmatpush1.msra.mxu0 %v1921
    %1923 = vmatprep.subr.mxu0 0.0
    %v1924 = vand.u32 %v84, 4294901760
    %1925 = vmatpush1.msra.mxu0 %v1924
    %1926 = vmatprep.subr.mxu0 0.0
    %v1927 = vand.u32 %v85, 4294901760
    %1928 = vmatpush1.msra.mxu0 %v1927
    %1929 = vmatprep.subr.mxu0 0.0
    %v1930 = vand.u32 %v86, 4294901760
    %1931 = vmatpush1.msra.mxu0 %v1930
    %v1932 = vand.u32 %v171, 4294901760
    %1933 = vmatprep.mubr.f32.mxu0 %v1932
    %v1934 = vand.u32 %v170, 4294901760
    %1935 = vmatmul.mubr.f32.gmra.mrb[0].mxu0 %v1934
    %v1936 = vpop.f32.mrb[0].mxu0
    %v1937 = vadd.f32 %v1833, %v1936
    %v1938 = vpop.f32.mrb[0].mxu0
    %1939 = vdwg.mxu0
    %1940 = vmatprep.subr.mxu0 0.0
    %v1941 = vand.u32 %v87, 4294901760
    %1942 = vmatpush1.msra.mxu0 %v1941
    %1943 = vmatprep.subr.mxu0 0.0
    %v1944 = vand.u32 %v88, 4294901760
    %1945 = vmatpush1.msra.mxu0 %v1944
    %1946 = vmatprep.subr.mxu0 0.0
    %v1947 = vand.u32 %v89, 4294901760
    %1948 = vmatpush1.msra.mxu0 %v1947
    %1949 = vmatprep.subr.mxu0 0.0
    %v1950 = vand.u32 %v90, 4294901760
    %1951 = vmatpush1.msra.mxu0 %v1950
    %1952 = vmatprep.subr.mxu0 0.0
    %v1953 = vand.u32 %v91, 4294901760
    %1954 = vmatpush1.msra.mxu0 %v1953
    %1955 = vmatprep.subr.mxu0 0.0
    %v1956 = vand.u32 %v92, 4294901760
    %1957 = vmatpush1.msra.mxu0 %v1956
    %1958 = vmatprep.subr.mxu0 0.0
    %v1959 = vand.u32 %v93, 4294901760
    %1960 = vmatpush1.msra.mxu0 %v1959
    %1961 = vmatprep.subr.mxu0 0.0
    %v1962 = vand.u32 %v94, 4294901760
    %1963 = vmatpush1.msra.mxu0 %v1962
    %1964 = vmatprep.subr.mxu0 0.0
    %v1965 = vand.u32 %v95, 4294901760
    %1966 = vmatpush1.msra.mxu0 %v1965
    %1967 = vmatprep.subr.mxu0 0.0
    %v1968 = vand.u32 %v96, 4294901760
    %1969 = vmatpush1.msra.mxu0 %v1968
    %1970 = vmatprep.subr.mxu0 0.0
    %v1971 = vand.u32 %v97, 4294901760
    %1972 = vmatpush1.msra.mxu0 %v1971
    %1973 = vmatprep.subr.mxu0 0.0
    %v1974 = vand.u32 %v98, 4294901760
    %1975 = vmatpush1.msra.mxu0 %v1974
    %1976 = vmatprep.subr.mxu0 0.0
    %v1977 = vand.u32 %v99, 4294901760
    %1978 = vmatpush1.msra.mxu0 %v1977
    %1979 = vmatprep.subr.mxu0 0.0
    %v1980 = vand.u32 %v100, 4294901760
    %1981 = vmatpush1.msra.mxu0 %v1980
    %1982 = vmatprep.subr.mxu0 0.0
    %v1983 = vand.u32 %v101, 4294901760
    %1984 = vmatpush1.msra.mxu0 %v1983
    %1985 = vmatprep.subr.mxu0 0.0
    %v1986 = vand.u32 %v102, 4294901760
    %1987 = vmatpush1.msra.mxu0 %v1986
    %1988 = vmatprep.subr.mxu0 0.0
    %v1989 = vand.u32 %v103, 4294901760
    %1990 = vmatpush1.msra.mxu0 %v1989
    %1991 = vmatprep.subr.mxu0 0.0
    %v1992 = vand.u32 %v104, 4294901760
    %1993 = vmatpush1.msra.mxu0 %v1992
    %1994 = vmatprep.subr.mxu0 0.0
    %v1995 = vand.u32 %v105, 4294901760
    %1996 = vmatpush1.msra.mxu0 %v1995
    %1997 = vmatprep.subr.mxu0 0.0
    %v1998 = vand.u32 %v106, 4294901760
    %1999 = vmatpush1.msra.mxu0 %v1998
    %2000 = vmatprep.subr.mxu0 0.0
    %v2001 = vand.u32 %v107, 4294901760
    %2002 = vmatpush1.msra.mxu0 %v2001
    %2003 = vmatprep.subr.mxu0 0.0
    %v2004 = vand.u32 %v108, 4294901760
    %2005 = vmatpush1.msra.mxu0 %v2004
    %2006 = vmatprep.subr.mxu0 0.0
    %v2007 = vand.u32 %v109, 4294901760
    %2008 = vmatpush1.msra.mxu0 %v2007
    %2009 = vmatprep.subr.mxu0 0.0
    %v2010 = vand.u32 %v110, 4294901760
    %2011 = vmatpush1.msra.mxu0 %v2010
    %2012 = vmatprep.subr.mxu0 0.0
    %v2013 = vand.u32 %v111, 4294901760
    %2014 = vmatpush1.msra.mxu0 %v2013
    %2015 = vmatprep.subr.mxu0 0.0
    %v2016 = vand.u32 %v112, 4294901760
    %2017 = vmatpush1.msra.mxu0 %v2016
    %2018 = vmatprep.subr.mxu0 0.0
    %v2019 = vand.u32 %v113, 4294901760
    %2020 = vmatpush1.msra.mxu0 %v2019
    %2021 = vmatprep.subr.mxu0 0.0
    %v2022 = vand.u32 %v114, 4294901760
    %2023 = vmatpush1.msra.mxu0 %v2022
    %2024 = vmatprep.subr.mxu0 0.0
    %v2025 = vand.u32 %v115, 4294901760
    %2026 = vmatpush1.msra.mxu0 %v2025
    %2027 = vmatprep.subr.mxu0 0.0
    %v2028 = vand.u32 %v116, 4294901760
    %2029 = vmatpush1.msra.mxu0 %v2028
    %2030 = vmatprep.subr.mxu0 0.0
    %v2031 = vand.u32 %v117, 4294901760
    %2032 = vmatpush1.msra.mxu0 %v2031
    %2033 = vmatprep.subr.mxu0 0.0
    %v2034 = vand.u32 %v118, 4294901760
    %2035 = vmatpush1.msra.mxu0 %v2034
    %v2036 = vand.u32 %v205, 4294901760
    %v2037 = vsub.f32 %v205, %v2036
    %v2038 = vand.u32 %v2037, 4294901760
    %v2039 = vsub.f32 %v2037, %v2038
    %v2040 = vand.u32 %v2039, 4294901760
    %2041 = vmatprep.mubr.f32.mxu0 %v2040
    %v2042 = vand.u32 %v204, 4294901760
    %v2043 = vsub.f32 %v204, %v2042
    %v2044 = vand.u32 %v2043, 4294901760
    %v2045 = vsub.f32 %v2043, %v2044
    %v2046 = vand.u32 %v2045, 4294901760
    %2047 = vmatmul.mubr.f32.gmra.mrb[0].mxu0 %v2046
    %v2048 = vpop.f32.mrb[0].mxu0
    %v2049 = vadd.f32 %v1937, %v2048
    %v2050 = vpop.f32.mrb[0].mxu0
    %2051 = vdwg.mxu0
    %2052 = vmatprep.subr.mxu0 0.0
    %v2053 = vand.u32 %v87, 4294901760
    %v2054 = vsub.f32 %v87, %v2053
    %v2055 = vand.u32 %v2054, 4294901760
    %v2056 = vsub.f32 %v2054, %v2055
    %v2057 = vand.u32 %v2056, 4294901760
    %2058 = vmatpush1.msra.mxu0 %v2057
    %2059 = vmatprep.subr.mxu0 0.0
    %v2060 = vand.u32 %v88, 4294901760
    %v2061 = vsub.f32 %v88, %v2060
    %v2062 = vand.u32 %v2061, 4294901760
    %v2063 = vsub.f32 %v2061, %v2062
    %v2064 = vand.u32 %v2063, 4294901760
    %2065 = vmatpush1.msra.mxu0 %v2064
    %2066 = vmatprep.subr.mxu0 0.0
    %v2067 = vand.u32 %v89, 4294901760
    %v2068 = vsub.f32 %v89, %v2067
    %v2069 = vand.u32 %v2068, 4294901760
    %v2070 = vsub.f32 %v2068, %v2069
    %v2071 = vand.u32 %v2070, 4294901760
    %2072 = vmatpush1.msra.mxu0 %v2071
    %2073 = vmatprep.subr.mxu0 0.0
    %v2074 = vand.u32 %v90, 4294901760
    %v2075 = vsub.f32 %v90, %v2074
    %v2076 = vand.u32 %v2075, 4294901760
    %v2077 = vsub.f32 %v2075, %v2076
    %v2078 = vand.u32 %v2077, 4294901760
    %2079 = vmatpush1.msra.mxu0 %v2078
    %2080 = vmatprep.subr.mxu0 0.0
    %v2081 = vand.u32 %v91, 4294901760
    %v2082 = vsub.f32 %v91, %v2081
    %v2083 = vand.u32 %v2082, 4294901760
    %v2084 = vsub.f32 %v2082, %v2083
    %v2085 = vand.u32 %v2084, 4294901760
    %2086 = vmatpush1.msra.mxu0 %v2085
    %2087 = vmatprep.subr.mxu0 0.0
    %v2088 = vand.u32 %v92, 4294901760
    %v2089 = vsub.f32 %v92, %v2088
    %v2090 = vand.u32 %v2089, 4294901760
    %v2091 = vsub.f32 %v2089, %v2090
    %v2092 = vand.u32 %v2091, 4294901760
    %2093 = vmatpush1.msra.mxu0 %v2092
    %2094 = vmatprep.subr.mxu0 0.0
    %v2095 = vand.u32 %v93, 4294901760
    %v2096 = vsub.f32 %v93, %v2095
    %v2097 = vand.u32 %v2096, 4294901760
    %v2098 = vsub.f32 %v2096, %v2097
    %v2099 = vand.u32 %v2098, 4294901760
    %2100 = vmatpush1.msra.mxu0 %v2099
    %2101 = vmatprep.subr.mxu0 0.0
    %v2102 = vand.u32 %v94, 4294901760
    %v2103 = vsub.f32 %v94, %v2102
    %v2104 = vand.u32 %v2103, 4294901760
    %v2105 = vsub.f32 %v2103, %v2104
    %v2106 = vand.u32 %v2105, 4294901760
    %2107 = vmatpush1.msra.mxu0 %v2106
    %2108 = vmatprep.subr.mxu0 0.0
    %v2109 = vand.u32 %v95, 4294901760
    %v2110 = vsub.f32 %v95, %v2109
    %v2111 = vand.u32 %v2110, 4294901760
    %v2112 = vsub.f32 %v2110, %v2111
    %v2113 = vand.u32 %v2112, 4294901760
    %2114 = vmatpush1.msra.mxu0 %v2113
    %2115 = vmatprep.subr.mxu0 0.0
    %v2116 = vand.u32 %v96, 4294901760
    %v2117 = vsub.f32 %v96, %v2116
    %v2118 = vand.u32 %v2117, 4294901760
    %v2119 = vsub.f32 %v2117, %v2118
    %v2120 = vand.u32 %v2119, 4294901760
    %2121 = vmatpush1.msra.mxu0 %v2120
    %2122 = vmatprep.subr.mxu0 0.0
    %v2123 = vand.u32 %v97, 4294901760
    %v2124 = vsub.f32 %v97, %v2123
    %v2125 = vand.u32 %v2124, 4294901760
    %v2126 = vsub.f32 %v2124, %v2125
    %v2127 = vand.u32 %v2126, 4294901760
    %2128 = vmatpush1.msra.mxu0 %v2127
    %2129 = vmatprep.subr.mxu0 0.0
    %v2130 = vand.u32 %v98, 4294901760
    %v2131 = vsub.f32 %v98, %v2130
    %v2132 = vand.u32 %v2131, 4294901760
    %v2133 = vsub.f32 %v2131, %v2132
    %v2134 = vand.u32 %v2133, 4294901760
    %2135 = vmatpush1.msra.mxu0 %v2134
    %2136 = vmatprep.subr.mxu0 0.0
    %v2137 = vand.u32 %v99, 4294901760
    %v2138 = vsub.f32 %v99, %v2137
    %v2139 = vand.u32 %v2138, 4294901760
    %v2140 = vsub.f32 %v2138, %v2139
    %v2141 = vand.u32 %v2140, 4294901760
    %2142 = vmatpush1.msra.mxu0 %v2141
    %2143 = vmatprep.subr.mxu0 0.0
    %v2144 = vand.u32 %v100, 4294901760
    %v2145 = vsub.f32 %v100, %v2144
    %v2146 = vand.u32 %v2145, 4294901760
    %v2147 = vsub.f32 %v2145, %v2146
    %v2148 = vand.u32 %v2147, 4294901760
    %2149 = vmatpush1.msra.mxu0 %v2148
    %2150 = vmatprep.subr.mxu0 0.0
    %v2151 = vand.u32 %v101, 4294901760
    %v2152 = vsub.f32 %v101, %v2151
    %v2153 = vand.u32 %v2152, 4294901760
    %v2154 = vsub.f32 %v2152, %v2153
    %v2155 = vand.u32 %v2154, 4294901760
    %2156 = vmatpush1.msra.mxu0 %v2155
    %2157 = vmatprep.subr.mxu0 0.0
    %v2158 = vand.u32 %v102, 4294901760
    %v2159 = vsub.f32 %v102, %v2158
    %v2160 = vand.u32 %v2159, 4294901760
    %v2161 = vsub.f32 %v2159, %v2160
    %v2162 = vand.u32 %v2161, 4294901760
    %2163 = vmatpush1.msra.mxu0 %v2162
    %2164 = vmatprep.subr.mxu0 0.0
    %v2165 = vand.u32 %v103, 4294901760
    %v2166 = vsub.f32 %v103, %v2165
    %v2167 = vand.u32 %v2166, 4294901760
    %v2168 = vsub.f32 %v2166, %v2167
    %v2169 = vand.u32 %v2168, 4294901760
    %2170 = vmatpush1.msra.mxu0 %v2169
    %2171 = vmatprep.subr.mxu0 0.0
    %v2172 = vand.u32 %v104, 4294901760
    %v2173 = vsub.f32 %v104, %v2172
    %v2174 = vand.u32 %v2173, 4294901760
    %v2175 = vsub.f32 %v2173, %v2174
    %v2176 = vand.u32 %v2175, 4294901760
    %2177 = vmatpush1.msra.mxu0 %v2176
    %2178 = vmatprep.subr.mxu0 0.0
    %v2179 = vand.u32 %v105, 4294901760
    %v2180 = vsub.f32 %v105, %v2179
    %v2181 = vand.u32 %v2180, 4294901760
    %v2182 = vsub.f32 %v2180, %v2181
    %v2183 = vand.u32 %v2182, 4294901760
    %2184 = vmatpush1.msra.mxu0 %v2183
    %2185 = vmatprep.subr.mxu0 0.0
    %v2186 = vand.u32 %v106, 4294901760
    %v2187 = vsub.f32 %v106, %v2186
    %v2188 = vand.u32 %v2187, 4294901760
    %v2189 = vsub.f32 %v2187, %v2188
    %v2190 = vand.u32 %v2189, 4294901760
    %2191 = vmatpush1.msra.mxu0 %v2190
    %2192 = vmatprep.subr.mxu0 0.0
    %v2193 = vand.u32 %v107, 4294901760
    %v2194 = vsub.f32 %v107, %v2193
    %v2195 = vand.u32 %v2194, 4294901760
    %v2196 = vsub.f32 %v2194, %v2195
    %v2197 = vand.u32 %v2196, 4294901760
    %2198 = vmatpush1.msra.mxu0 %v2197
    %2199 = vmatprep.subr.mxu0 0.0
    %v2200 = vand.u32 %v108, 4294901760
    %v2201 = vsub.f32 %v108, %v2200
    %v2202 = vand.u32 %v2201, 4294901760
    %v2203 = vsub.f32 %v2201, %v2202
    %v2204 = vand.u32 %v2203, 4294901760
    %2205 = vmatpush1.msra.mxu0 %v2204
    %2206 = vmatprep.subr.mxu0 0.0
    %v2207 = vand.u32 %v109, 4294901760
    %v2208 = vsub.f32 %v109, %v2207
    %v2209 = vand.u32 %v2208, 4294901760
    %v2210 = vsub.f32 %v2208, %v2209
    %v2211 = vand.u32 %v2210, 4294901760
    %2212 = vmatpush1.msra.mxu0 %v2211
    %2213 = vmatprep.subr.mxu0 0.0
    %v2214 = vand.u32 %v110, 4294901760
    %v2215 = vsub.f32 %v110, %v2214
    %v2216 = vand.u32 %v2215, 4294901760
    %v2217 = vsub.f32 %v2215, %v2216
    %v2218 = vand.u32 %v2217, 4294901760
    %2219 = vmatpush1.msra.mxu0 %v2218
    %2220 = vmatprep.subr.mxu0 0.0
    %v2221 = vand.u32 %v111, 4294901760
    %v2222 = vsub.f32 %v111, %v2221
    %v2223 = vand.u32 %v2222, 4294901760
    %v2224 = vsub.f32 %v2222, %v2223
    %v2225 = vand.u32 %v2224, 4294901760
    %2226 = vmatpush1.msra.mxu0 %v2225
    %2227 = vmatprep.subr.mxu0 0.0
    %v2228 = vand.u32 %v112, 4294901760
    %v2229 = vsub.f32 %v112, %v2228
    %v2230 = vand.u32 %v2229, 4294901760
    %v2231 = vsub.f32 %v2229, %v2230
    %v2232 = vand.u32 %v2231, 4294901760
    %2233 = vmatpush1.msra.mxu0 %v2232
    %2234 = vmatprep.subr.mxu0 0.0
    %v2235 = vand.u32 %v113, 4294901760
    %v2236 = vsub.f32 %v113, %v2235
    %v2237 = vand.u32 %v2236, 4294901760
    %v2238 = vsub.f32 %v2236, %v2237
    %v2239 = vand.u32 %v2238, 4294901760
    %2240 = vmatpush1.msra.mxu0 %v2239
    %2241 = vmatprep.subr.mxu0 0.0
    %v2242 = vand.u32 %v114, 4294901760
    %v2243 = vsub.f32 %v114, %v2242
    %v2244 = vand.u32 %v2243, 4294901760
    %v2245 = vsub.f32 %v2243, %v2244
    %v2246 = vand.u32 %v2245, 4294901760
    %2247 = vmatpush1.msra.mxu0 %v2246
    %2248 = vmatprep.subr.mxu0 0.0
    %v2249 = vand.u32 %v115, 4294901760
    %v2250 = vsub.f32 %v115, %v2249
    %v2251 = vand.u32 %v2250, 4294901760
    %v2252 = vsub.f32 %v2250, %v2251
    %v2253 = vand.u32 %v2252, 4294901760
    %2254 = vmatpush1.msra.mxu0 %v2253
    %2255 = vmatprep.subr.mxu0 0.0
    %v2256 = vand.u32 %v116, 4294901760
    %v2257 = vsub.f32 %v116, %v2256
    %v2258 = vand.u32 %v2257, 4294901760
    %v2259 = vsub.f32 %v2257, %v2258
    %v2260 = vand.u32 %v2259, 4294901760
    %2261 = vmatpush1.msra.mxu0 %v2260
    %2262 = vmatprep.subr.mxu0 0.0
    %v2263 = vand.u32 %v117, 4294901760
    %v2264 = vsub.f32 %v117, %v2263
    %v2265 = vand.u32 %v2264, 4294901760
    %v2266 = vsub.f32 %v2264, %v2265
    %v2267 = vand.u32 %v2266, 4294901760
    %2268 = vmatpush1.msra.mxu0 %v2267
    %2269 = vmatprep.subr.mxu0 0.0
    %v2270 = vand.u32 %v118, 4294901760
    %v2271 = vsub.f32 %v118, %v2270
    %v2272 = vand.u32 %v2271, 4294901760
    %v2273 = vsub.f32 %v2271, %v2272
    %v2274 = vand.u32 %v2273, 4294901760
    %2275 = vmatpush1.msra.mxu0 %v2274
    %v2276 = vand.u32 %v205, 4294901760
    %2277 = vmatprep.mubr.f32.mxu0 %v2276
    %v2278 = vand.u32 %v204, 4294901760
    %2279 = vmatmul.mubr.f32.gmra.mrb[0].mxu0 %v2278
    %v2280 = vpop.f32.mrb[0].mxu0
    %v2281 = vadd.f32 %v2049, %v2280
    %v2282 = vpop.f32.mrb[0].mxu0
    %2283 = vdwg.mxu0
    %2284 = vmatprep.subr.mxu0 0.0
    %v2285 = vand.u32 %v87, 4294901760
    %v2286 = vsub.f32 %v87, %v2285
    %2287 = vmatpush1.msra.mxu0 %v2286
    %2288 = vmatprep.subr.mxu0 0.0
    %v2289 = vand.u32 %v88, 4294901760
    %v2290 = vsub.f32 %v88, %v2289
    %2291 = vmatpush1.msra.mxu0 %v2290
    %2292 = vmatprep.subr.mxu0 0.0
    %v2293 = vand.u32 %v89, 4294901760
    %v2294 = vsub.f32 %v89, %v2293
    %2295 = vmatpush1.msra.mxu0 %v2294
    %2296 = vmatprep.subr.mxu0 0.0
    %v2297 = vand.u32 %v90, 4294901760
    %v2298 = vsub.f32 %v90, %v2297
    %2299 = vmatpush1.msra.mxu0 %v2298
    %2300 = vmatprep.subr.mxu0 0.0
    %v2301 = vand.u32 %v91, 4294901760
    %v2302 = vsub.f32 %v91, %v2301
    %2303 = vmatpush1.msra.mxu0 %v2302
    %2304 = vmatprep.subr.mxu0 0.0
    %v2305 = vand.u32 %v92, 4294901760
    %v2306 = vsub.f32 %v92, %v2305
    %2307 = vmatpush1.msra.mxu0 %v2306
    %2308 = vmatprep.subr.mxu0 0.0
    %v2309 = vand.u32 %v93, 4294901760
    %v2310 = vsub.f32 %v93, %v2309
    %2311 = vmatpush1.msra.mxu0 %v2310
    %2312 = vmatprep.subr.mxu0 0.0
    %v2313 = vand.u32 %v94, 4294901760
    %v2314 = vsub.f32 %v94, %v2313
    %2315 = vmatpush1.msra.mxu0 %v2314
    %2316 = vmatprep.subr.mxu0 0.0
    %v2317 = vand.u32 %v95, 4294901760
    %v2318 = vsub.f32 %v95, %v2317
    %2319 = vmatpush1.msra.mxu0 %v2318
    %2320 = vmatprep.subr.mxu0 0.0
    %v2321 = vand.u32 %v96, 4294901760
    %v2322 = vsub.f32 %v96, %v2321
    %2323 = vmatpush1.msra.mxu0 %v2322
    %2324 = vmatprep.subr.mxu0 0.0
    %v2325 = vand.u32 %v97, 4294901760
    %v2326 = vsub.f32 %v97, %v2325
    %2327 = vmatpush1.msra.mxu0 %v2326
    %2328 = vmatprep.subr.mxu0 0.0
    %v2329 = vand.u32 %v98, 4294901760
    %v2330 = vsub.f32 %v98, %v2329
    %2331 = vmatpush1.msra.mxu0 %v2330
    %2332 = vmatprep.subr.mxu0 0.0
    %v2333 = vand.u32 %v99, 4294901760
    %v2334 = vsub.f32 %v99, %v2333
    %2335 = vmatpush1.msra.mxu0 %v2334
    %2336 = vmatprep.subr.mxu0 0.0
    %v2337 = vand.u32 %v100, 4294901760
    %v2338 = vsub.f32 %v100, %v2337
    %2339 = vmatpush1.msra.mxu0 %v2338
    %2340 = vmatprep.subr.mxu0 0.0
    %v2341 = vand.u32 %v101, 4294901760
    %v2342 = vsub.f32 %v101, %v2341
    %2343 = vmatpush1.msra.mxu0 %v2342
    %2344 = vmatprep.subr.mxu0 0.0
    %v2345 = vand.u32 %v102, 4294901760
    %v2346 = vsub.f32 %v102, %v2345
    %2347 = vmatpush1.msra.mxu0 %v2346
    %2348 = vmatprep.subr.mxu0 0.0
    %v2349 = vand.u32 %v103, 4294901760
    %v2350 = vsub.f32 %v103, %v2349
    %2351 = vmatpush1.msra.mxu0 %v2350
    %2352 = vmatprep.subr.mxu0 0.0
    %v2353 = vand.u32 %v104, 4294901760
    %v2354 = vsub.f32 %v104, %v2353
    %2355 = vmatpush1.msra.mxu0 %v2354
    %2356 = vmatprep.subr.mxu0 0.0
    %v2357 = vand.u32 %v105, 4294901760
    %v2358 = vsub.f32 %v105, %v2357
    %2359 = vmatpush1.msra.mxu0 %v2358
    %2360 = vmatprep.subr.mxu0 0.0
    %v2361 = vand.u32 %v106, 4294901760
    %v2362 = vsub.f32 %v106, %v2361
    %2363 = vmatpush1.msra.mxu0 %v2362
    %2364 = vmatprep.subr.mxu0 0.0
    %v2365 = vand.u32 %v107, 4294901760
    %v2366 = vsub.f32 %v107, %v2365
    %2367 = vmatpush1.msra.mxu0 %v2366
    %2368 = vmatprep.subr.mxu0 0.0
    %v2369 = vand.u32 %v108, 4294901760
    %v2370 = vsub.f32 %v108, %v2369
    %2371 = vmatpush1.msra.mxu0 %v2370
    %2372 = vmatprep.subr.mxu0 0.0
    %v2373 = vand.u32 %v109, 4294901760
    %v2374 = vsub.f32 %v109, %v2373
    %2375 = vmatpush1.msra.mxu0 %v2374
    %2376 = vmatprep.subr.mxu0 0.0
    %v2377 = vand.u32 %v110, 4294901760
    %v2378 = vsub.f32 %v110, %v2377
    %2379 = vmatpush1.msra.mxu0 %v2378
    %2380 = vmatprep.subr.mxu0 0.0
    %v2381 = vand.u32 %v111, 4294901760
    %v2382 = vsub.f32 %v111, %v2381
    %2383 = vmatpush1.msra.mxu0 %v2382
    %2384 = vmatprep.subr.mxu0 0.0
    %v2385 = vand.u32 %v112, 4294901760
    %v2386 = vsub.f32 %v112, %v2385
    %2387 = vmatpush1.msra.mxu0 %v2386
    %2388 = vmatprep.subr.mxu0 0.0
    %v2389 = vand.u32 %v113, 4294901760
    %v2390 = vsub.f32 %v113, %v2389
    %2391 = vmatpush1.msra.mxu0 %v2390
    %2392 = vmatprep.subr.mxu0 0.0
    %v2393 = vand.u32 %v114, 4294901760
    %v2394 = vsub.f32 %v114, %v2393
    %2395 = vmatpush1.msra.mxu0 %v2394
    %2396 = vmatprep.subr.mxu0 0.0
    %v2397 = vand.u32 %v115, 4294901760
    %v2398 = vsub.f32 %v115, %v2397
    %2399 = vmatpush1.msra.mxu0 %v2398
    %2400 = vmatprep.subr.mxu0 0.0
    %v2401 = vand.u32 %v116, 4294901760
    %v2402 = vsub.f32 %v116, %v2401
    %2403 = vmatpush1.msra.mxu0 %v2402
    %2404 = vmatprep.subr.mxu0 0.0
    %v2405 = vand.u32 %v117, 4294901760
    %v2406 = vsub.f32 %v117, %v2405
    %2407 = vmatpush1.msra.mxu0 %v2406
    %2408 = vmatprep.subr.mxu0 0.0
    %v2409 = vand.u32 %v118, 4294901760
    %v2410 = vsub.f32 %v118, %v2409
    %2411 = vmatpush1.msra.mxu0 %v2410
    %v2412 = vand.u32 %v205, 4294901760
    %v2413 = vsub.f32 %v205, %v2412
    %2414 = vmatprep.mubr.f32.mxu0 %v2413
    %v2415 = vand.u32 %v204, 4294901760
    %v2416 = vsub.f32 %v204, %v2415
    %2417 = vmatmul.mubr.f32.gmra.mrb[0].mxu0 %v2416
    %v2418 = vpop.f32.mrb[0].mxu0
    %v2419 = vadd.f32 %v2281, %v2418
    %v2420 = vpop.f32.mrb[0].mxu0
    %2421 = vdwg.mxu0
    %2422 = vmatprep.subr.mxu0 0.0
    %v2423 = vand.u32 %v87, 4294901760
    %2424 = vmatpush1.msra.mxu0 %v2423
    %2425 = vmatprep.subr.mxu0 0.0
    %v2426 = vand.u32 %v88, 4294901760
    %2427 = vmatpush1.msra.mxu0 %v2426
    %2428 = vmatprep.subr.mxu0 0.0
    %v2429 = vand.u32 %v89, 4294901760
    %2430 = vmatpush1.msra.mxu0 %v2429
    %2431 = vmatprep.subr.mxu0 0.0
    %v2432 = vand.u32 %v90, 4294901760
    %2433 = vmatpush1.msra.mxu0 %v2432
    %2434 = vmatprep.subr.mxu0 0.0
    %v2435 = vand.u32 %v91, 4294901760
    %2436 = vmatpush1.msra.mxu0 %v2435
    %2437 = vmatprep.subr.mxu0 0.0
    %v2438 = vand.u32 %v92, 4294901760
    %2439 = vmatpush1.msra.mxu0 %v2438
    %2440 = vmatprep.subr.mxu0 0.0
    %v2441 = vand.u32 %v93, 4294901760
    %2442 = vmatpush1.msra.mxu0 %v2441
    %2443 = vmatprep.subr.mxu0 0.0
    %v2444 = vand.u32 %v94, 4294901760
    %2445 = vmatpush1.msra.mxu0 %v2444
    %2446 = vmatprep.subr.mxu0 0.0
    %v2447 = vand.u32 %v95, 4294901760
    %2448 = vmatpush1.msra.mxu0 %v2447
    %2449 = vmatprep.subr.mxu0 0.0
    %v2450 = vand.u32 %v96, 4294901760
    %2451 = vmatpush1.msra.mxu0 %v2450
    %2452 = vmatprep.subr.mxu0 0.0
    %v2453 = vand.u32 %v97, 4294901760
    %2454 = vmatpush1.msra.mxu0 %v2453
    %2455 = vmatprep.subr.mxu0 0.0
    %v2456 = vand.u32 %v98, 4294901760
    %2457 = vmatpush1.msra.mxu0 %v2456
    %2458 = vmatprep.subr.mxu0 0.0
    %v2459 = vand.u32 %v99, 4294901760
    %2460 = vmatpush1.msra.mxu0 %v2459
    %2461 = vmatprep.subr.mxu0 0.0
    %v2462 = vand.u32 %v100, 4294901760
    %2463 = vmatpush1.msra.mxu0 %v2462
    %2464 = vmatprep.subr.mxu0 0.0
    %v2465 = vand.u32 %v101, 4294901760
    %2466 = vmatpush1.msra.mxu0 %v2465
    %2467 = vmatprep.subr.mxu0 0.0
    %v2468 = vand.u32 %v102, 4294901760
    %2469 = vmatpush1.msra.mxu0 %v2468
    %2470 = vmatprep.subr.mxu0 0.0
    %v2471 = vand.u32 %v103, 4294901760
    %2472 = vmatpush1.msra.mxu0 %v2471
    %2473 = vmatprep.subr.mxu0 0.0
    %v2474 = vand.u32 %v104, 4294901760
    %2475 = vmatpush1.msra.mxu0 %v2474
    %2476 = vmatprep.subr.mxu0 0.0
    %v2477 = vand.u32 %v105, 4294901760
    %2478 = vmatpush1.msra.mxu0 %v2477
    %2479 = vmatprep.subr.mxu0 0.0
    %v2480 = vand.u32 %v106, 4294901760
    %2481 = vmatpush1.msra.mxu0 %v2480
    %2482 = vmatprep.subr.mxu0 0.0
    %v2483 = vand.u32 %v107, 4294901760
    %2484 = vmatpush1.msra.mxu0 %v2483
    %2485 = vmatprep.subr.mxu0 0.0
    %v2486 = vand.u32 %v108, 4294901760
    %2487 = vmatpush1.msra.mxu0 %v2486
    %2488 = vmatprep.subr.mxu0 0.0
    %v2489 = vand.u32 %v109, 4294901760
    %2490 = vmatpush1.msra.mxu0 %v2489
    %2491 = vmatprep.subr.mxu0 0.0
    %v2492 = vand.u32 %v110, 4294901760
    %2493 = vmatpush1.msra.mxu0 %v2492
    %2494 = vmatprep.subr.mxu0 0.0
    %v2495 = vand.u32 %v111, 4294901760
    %2496 = vmatpush1.msra.mxu0 %v2495
    %2497 = vmatprep.subr.mxu0 0.0
    %v2498 = vand.u32 %v112, 4294901760
    %2499 = vmatpush1.msra.mxu0 %v2498
    %2500 = vmatprep.subr.mxu0 0.0
    %v2501 = vand.u32 %v113, 4294901760
    %2502 = vmatpush1.msra.mxu0 %v2501
    %2503 = vmatprep.subr.mxu0 0.0
    %v2504 = vand.u32 %v114, 4294901760
    %2505 = vmatpush1.msra.mxu0 %v2504
    %2506 = vmatprep.subr.mxu0 0.0
    %v2507 = vand.u32 %v115, 4294901760
    %2508 = vmatpush1.msra.mxu0 %v2507
    %2509 = vmatprep.subr.mxu0 0.0
    %v2510 = vand.u32 %v116, 4294901760
    %2511 = vmatpush1.msra.mxu0 %v2510
    %2512 = vmatprep.subr.mxu0 0.0
    %v2513 = vand.u32 %v117, 4294901760
    %2514 = vmatpush1.msra.mxu0 %v2513
    %2515 = vmatprep.subr.mxu0 0.0
    %v2516 = vand.u32 %v118, 4294901760
    %2517 = vmatpush1.msra.mxu0 %v2516
    %v2518 = vand.u32 %v205, 4294901760
    %v2519 = vsub.f32 %v205, %v2518
    %v2520 = vand.u32 %v2519, 4294901760
    %2521 = vmatprep.mubr.f32.mxu0 %v2520
    %v2522 = vand.u32 %v204, 4294901760
    %v2523 = vsub.f32 %v204, %v2522
    %v2524 = vand.u32 %v2523, 4294901760
    %2525 = vmatmul.mubr.f32.gmra.mrb[0].mxu0 %v2524
    %v2526 = vpop.f32.mrb[0].mxu0
    %v2527 = vadd.f32 %v2419, %v2526
    %v2528 = vpop.f32.mrb[0].mxu0
    %2529 = vdwg.mxu0
    %2530 = vmatprep.subr.mxu0 0.0
    %v2531 = vand.u32 %v87, 4294901760
    %v2532 = vsub.f32 %v87, %v2531
    %v2533 = vand.u32 %v2532, 4294901760
    %2534 = vmatpush1.msra.mxu0 %v2533
    %2535 = vmatprep.subr.mxu0 0.0
    %v2536 = vand.u32 %v88, 4294901760
    %v2537 = vsub.f32 %v88, %v2536
    %v2538 = vand.u32 %v2537, 4294901760
    %2539 = vmatpush1.msra.mxu0 %v2538
    %2540 = vmatprep.subr.mxu0 0.0
    %v2541 = vand.u32 %v89, 4294901760
    %v2542 = vsub.f32 %v89, %v2541
    %v2543 = vand.u32 %v2542, 4294901760
    %2544 = vmatpush1.msra.mxu0 %v2543
    %2545 = vmatprep.subr.mxu0 0.0
    %v2546 = vand.u32 %v90, 4294901760
    %v2547 = vsub.f32 %v90, %v2546
    %v2548 = vand.u32 %v2547, 4294901760
    %2549 = vmatpush1.msra.mxu0 %v2548
    %2550 = vmatprep.subr.mxu0 0.0
    %v2551 = vand.u32 %v91, 4294901760
    %v2552 = vsub.f32 %v91, %v2551
    %v2553 = vand.u32 %v2552, 4294901760
    %2554 = vmatpush1.msra.mxu0 %v2553
    %2555 = vmatprep.subr.mxu0 0.0
    %v2556 = vand.u32 %v92, 4294901760
    %v2557 = vsub.f32 %v92, %v2556
    %v2558 = vand.u32 %v2557, 4294901760
    %2559 = vmatpush1.msra.mxu0 %v2558
    %2560 = vmatprep.subr.mxu0 0.0
    %v2561 = vand.u32 %v93, 4294901760
    %v2562 = vsub.f32 %v93, %v2561
    %v2563 = vand.u32 %v2562, 4294901760
    %2564 = vmatpush1.msra.mxu0 %v2563
    %2565 = vmatprep.subr.mxu0 0.0
    %v2566 = vand.u32 %v94, 4294901760
    %v2567 = vsub.f32 %v94, %v2566
    %v2568 = vand.u32 %v2567, 4294901760
    %2569 = vmatpush1.msra.mxu0 %v2568
    %2570 = vmatprep.subr.mxu0 0.0
    %v2571 = vand.u32 %v95, 4294901760
    %v2572 = vsub.f32 %v95, %v2571
    %v2573 = vand.u32 %v2572, 4294901760
    %2574 = vmatpush1.msra.mxu0 %v2573
    %2575 = vmatprep.subr.mxu0 0.0
    %v2576 = vand.u32 %v96, 4294901760
    %v2577 = vsub.f32 %v96, %v2576
    %v2578 = vand.u32 %v2577, 4294901760
    %2579 = vmatpush1.msra.mxu0 %v2578
    %2580 = vmatprep.subr.mxu0 0.0
    %v2581 = vand.u32 %v97, 4294901760
    %v2582 = vsub.f32 %v97, %v2581
    %v2583 = vand.u32 %v2582, 4294901760
    %2584 = vmatpush1.msra.mxu0 %v2583
    %2585 = vmatprep.subr.mxu0 0.0
    %v2586 = vand.u32 %v98, 4294901760
    %v2587 = vsub.f32 %v98, %v2586
    %v2588 = vand.u32 %v2587, 4294901760
    %2589 = vmatpush1.msra.mxu0 %v2588
    %2590 = vmatprep.subr.mxu0 0.0
    %v2591 = vand.u32 %v99, 4294901760
    %v2592 = vsub.f32 %v99, %v2591
    %v2593 = vand.u32 %v2592, 4294901760
    %2594 = vmatpush1.msra.mxu0 %v2593
    %2595 = vmatprep.subr.mxu0 0.0
    %v2596 = vand.u32 %v100, 4294901760
    %v2597 = vsub.f32 %v100, %v2596
    %v2598 = vand.u32 %v2597, 4294901760
    %2599 = vmatpush1.msra.mxu0 %v2598
    %2600 = vmatprep.subr.mxu0 0.0
    %v2601 = vand.u32 %v101, 4294901760
    %v2602 = vsub.f32 %v101, %v2601
    %v2603 = vand.u32 %v2602, 4294901760
    %2604 = vmatpush1.msra.mxu0 %v2603
    %2605 = vmatprep.subr.mxu0 0.0
    %v2606 = vand.u32 %v102, 4294901760
    %v2607 = vsub.f32 %v102, %v2606
    %v2608 = vand.u32 %v2607, 4294901760
    %2609 = vmatpush1.msra.mxu0 %v2608
    %2610 = vmatprep.subr.mxu0 0.0
    %v2611 = vand.u32 %v103, 4294901760
    %v2612 = vsub.f32 %v103, %v2611
    %v2613 = vand.u32 %v2612, 4294901760
    %2614 = vmatpush1.msra.mxu0 %v2613
    %2615 = vmatprep.subr.mxu0 0.0
    %v2616 = vand.u32 %v104, 4294901760
    %v2617 = vsub.f32 %v104, %v2616
    %v2618 = vand.u32 %v2617, 4294901760
    %2619 = vmatpush1.msra.mxu0 %v2618
    %2620 = vmatprep.subr.mxu0 0.0
    %v2621 = vand.u32 %v105, 4294901760
    %v2622 = vsub.f32 %v105, %v2621
    %v2623 = vand.u32 %v2622, 4294901760
    %2624 = vmatpush1.msra.mxu0 %v2623
    %2625 = vmatprep.subr.mxu0 0.0
    %v2626 = vand.u32 %v106, 4294901760
    %v2627 = vsub.f32 %v106, %v2626
    %v2628 = vand.u32 %v2627, 4294901760
    %2629 = vmatpush1.msra.mxu0 %v2628
    %2630 = vmatprep.subr.mxu0 0.0
    %v2631 = vand.u32 %v107, 4294901760
    %v2632 = vsub.f32 %v107, %v2631
    %v2633 = vand.u32 %v2632, 4294901760
    %2634 = vmatpush1.msra.mxu0 %v2633
    %2635 = vmatprep.subr.mxu0 0.0
    %v2636 = vand.u32 %v108, 4294901760
    %v2637 = vsub.f32 %v108, %v2636
    %v2638 = vand.u32 %v2637, 4294901760
    %2639 = vmatpush1.msra.mxu0 %v2638
    %2640 = vmatprep.subr.mxu0 0.0
    %v2641 = vand.u32 %v109, 4294901760
    %v2642 = vsub.f32 %v109, %v2641
    %v2643 = vand.u32 %v2642, 4294901760
    %2644 = vmatpush1.msra.mxu0 %v2643
    %2645 = vmatprep.subr.mxu0 0.0
    %v2646 = vand.u32 %v110, 4294901760
    %v2647 = vsub.f32 %v110, %v2646
    %v2648 = vand.u32 %v2647, 4294901760
    %2649 = vmatpush1.msra.mxu0 %v2648
    %2650 = vmatprep.subr.mxu0 0.0
    %v2651 = vand.u32 %v111, 4294901760
    %v2652 = vsub.f32 %v111, %v2651
    %v2653 = vand.u32 %v2652, 4294901760
    %2654 = vmatpush1.msra.mxu0 %v2653
    %2655 = vmatprep.subr.mxu0 0.0
    %v2656 = vand.u32 %v112, 4294901760
    %v2657 = vsub.f32 %v112, %v2656
    %v2658 = vand.u32 %v2657, 4294901760
    %2659 = vmatpush1.msra.mxu0 %v2658
    %2660 = vmatprep.subr.mxu0 0.0
    %v2661 = vand.u32 %v113, 4294901760
    %v2662 = vsub.f32 %v113, %v2661
    %v2663 = vand.u32 %v2662, 4294901760
    %2664 = vmatpush1.msra.mxu0 %v2663
    %2665 = vmatprep.subr.mxu0 0.0
    %v2666 = vand.u32 %v114, 4294901760
    %v2667 = vsub.f32 %v114, %v2666
    %v2668 = vand.u32 %v2667, 4294901760
    %2669 = vmatpush1.msra.mxu0 %v2668
    %2670 = vmatprep.subr.mxu0 0.0
    %v2671 = vand.u32 %v115, 4294901760
    %v2672 = vsub.f32 %v115, %v2671
    %v2673 = vand.u32 %v2672, 4294901760
    %2674 = vmatpush1.msra.mxu0 %v2673
    %2675 = vmatprep.subr.mxu0 0.0
    %v2676 = vand.u32 %v116, 4294901760
    %v2677 = vsub.f32 %v116, %v2676
    %v2678 = vand.u32 %v2677, 4294901760
    %2679 = vmatpush1.msra.mxu0 %v2678
    %2680 = vmatprep.subr.mxu0 0.0
    %v2681 = vand.u32 %v117, 4294901760
    %v2682 = vsub.f32 %v117, %v2681
    %v2683 = vand.u32 %v2682, 4294901760
    %2684 = vmatpush1.msra.mxu0 %v2683
    %2685 = vmatprep.subr.mxu0 0.0
    %v2686 = vand.u32 %v118, 4294901760
    %v2687 = vsub.f32 %v118, %v2686
    %v2688 = vand.u32 %v2687, 4294901760
    %2689 = vmatpush1.msra.mxu0 %v2688
    %v2690 = vand.u32 %v205, 4294901760
    %2691 = vmatprep.mubr.f32.mxu0 %v2690
    %v2692 = vand.u32 %v204, 4294901760
    %2693 = vmatmul.mubr.f32.gmra.mrb[0].mxu0 %v2692
    %v2694 = vpop.f32.mrb[0].mxu0
    %v2695 = vadd.f32 %v2527, %v2694
    %v2696 = vpop.f32.mrb[0].mxu0
    %2697 = vdwg.mxu0
    %2698 = vmatprep.subr.mxu0 0.0
    %v2699 = vand.u32 %v87, 4294901760
    %2700 = vmatpush1.msra.mxu0 %v2699
    %2701 = vmatprep.subr.mxu0 0.0
    %v2702 = vand.u32 %v88, 4294901760
    %2703 = vmatpush1.msra.mxu0 %v2702
    %2704 = vmatprep.subr.mxu0 0.0
    %v2705 = vand.u32 %v89, 4294901760
    %2706 = vmatpush1.msra.mxu0 %v2705
    %2707 = vmatprep.subr.mxu0 0.0
    %v2708 = vand.u32 %v90, 4294901760
    %2709 = vmatpush1.msra.mxu0 %v2708
    %2710 = vmatprep.subr.mxu0 0.0
    %v2711 = vand.u32 %v91, 4294901760
    %2712 = vmatpush1.msra.mxu0 %v2711
    %2713 = vmatprep.subr.mxu0 0.0
    %v2714 = vand.u32 %v92, 4294901760
    %2715 = vmatpush1.msra.mxu0 %v2714
    %2716 = vmatprep.subr.mxu0 0.0
    %v2717 = vand.u32 %v93, 4294901760
    %2718 = vmatpush1.msra.mxu0 %v2717
    %2719 = vmatprep.subr.mxu0 0.0
    %v2720 = vand.u32 %v94, 4294901760
    %2721 = vmatpush1.msra.mxu0 %v2720
    %2722 = vmatprep.subr.mxu0 0.0
    %v2723 = vand.u32 %v95, 4294901760
    %2724 = vmatpush1.msra.mxu0 %v2723
    %2725 = vmatprep.subr.mxu0 0.0
    %v2726 = vand.u32 %v96, 4294901760
    %2727 = vmatpush1.msra.mxu0 %v2726
    %2728 = vmatprep.subr.mxu0 0.0
    %v2729 = vand.u32 %v97, 4294901760
    %2730 = vmatpush1.msra.mxu0 %v2729
    %2731 = vmatprep.subr.mxu0 0.0
    %v2732 = vand.u32 %v98, 4294901760
    %2733 = vmatpush1.msra.mxu0 %v2732
    %2734 = vmatprep.subr.mxu0 0.0
    %v2735 = vand.u32 %v99, 4294901760
    %2736 = vmatpush1.msra.mxu0 %v2735
    %2737 = vmatprep.subr.mxu0 0.0
    %v2738 = vand.u32 %v100, 4294901760
    %2739 = vmatpush1.msra.mxu0 %v2738
    %2740 = vmatprep.subr.mxu0 0.0
    %v2741 = vand.u32 %v101, 4294901760
    %2742 = vmatpush1.msra.mxu0 %v2741
    %2743 = vmatprep.subr.mxu0 0.0
    %v2744 = vand.u32 %v102, 4294901760
    %2745 = vmatpush1.msra.mxu0 %v2744
    %2746 = vmatprep.subr.mxu0 0.0
    %v2747 = vand.u32 %v103, 4294901760
    %2748 = vmatpush1.msra.mxu0 %v2747
    %2749 = vmatprep.subr.mxu0 0.0
    %v2750 = vand.u32 %v104, 4294901760
    %2751 = vmatpush1.msra.mxu0 %v2750
    %2752 = vmatprep.subr.mxu0 0.0
    %v2753 = vand.u32 %v105, 4294901760
    %2754 = vmatpush1.msra.mxu0 %v2753
    %2755 = vmatprep.subr.mxu0 0.0
    %v2756 = vand.u32 %v106, 4294901760
    %2757 = vmatpush1.msra.mxu0 %v2756
    %2758 = vmatprep.subr.mxu0 0.0
    %v2759 = vand.u32 %v107, 4294901760
    %2760 = vmatpush1.msra.mxu0 %v2759
    %2761 = vmatprep.subr.mxu0 0.0
    %v2762 = vand.u32 %v108, 4294901760
    %2763 = vmatpush1.msra.mxu0 %v2762
    %2764 = vmatprep.subr.mxu0 0.0
    %v2765 = vand.u32 %v109, 4294901760
    %2766 = vmatpush1.msra.mxu0 %v2765
    %2767 = vmatprep.subr.mxu0 0.0
    %v2768 = vand.u32 %v110, 4294901760
    %2769 = vmatpush1.msra.mxu0 %v2768
    %2770 = vmatprep.subr.mxu0 0.0
    %v2771 = vand.u32 %v111, 4294901760
    %2772 = vmatpush1.msra.mxu0 %v2771
    %2773 = vmatprep.subr.mxu0 0.0
    %v2774 = vand.u32 %v112, 4294901760
    %2775 = vmatpush1.msra.mxu0 %v2774
    %2776 = vmatprep.subr.mxu0 0.0
    %v2777 = vand.u32 %v113, 4294901760
    %2778 = vmatpush1.msra.mxu0 %v2777
    %2779 = vmatprep.subr.mxu0 0.0
    %v2780 = vand.u32 %v114, 4294901760
    %2781 = vmatpush1.msra.mxu0 %v2780
    %2782 = vmatprep.subr.mxu0 0.0
    %v2783 = vand.u32 %v115, 4294901760
    %2784 = vmatpush1.msra.mxu0 %v2783
    %2785 = vmatprep.subr.mxu0 0.0
    %v2786 = vand.u32 %v116, 4294901760
    %2787 = vmatpush1.msra.mxu0 %v2786
    %2788 = vmatprep.subr.mxu0 0.0
    %v2789 = vand.u32 %v117, 4294901760
    %2790 = vmatpush1.msra.mxu0 %v2789
    %2791 = vmatprep.subr.mxu0 0.0
    %v2792 = vand.u32 %v118, 4294901760
    %2793 = vmatpush1.msra.mxu0 %v2792
    %v2794 = vand.u32 %v205, 4294901760
    %2795 = vmatprep.mubr.f32.mxu0 %v2794
    %v2796 = vand.u32 %v204, 4294901760
    %2797 = vmatmul.mubr.f32.gmra.mrb[0].mxu0 %v2796
    %v2798 = vpop.f32.mrb[0].mxu0
    %v2799 = vadd.f32 %v2695, %v2798
    %v2800 = vpop.f32.mrb[0].mxu0
    %2801 = vdwg.mxu0
    %2802 = vmatprep.subr.mxu0 0.0
    %v2803 = vand.u32 %v119, 4294901760
    %2804 = vmatpush1.msra.mxu0 %v2803
    %2805 = vmatprep.subr.mxu0 0.0
    %v2806 = vand.u32 %v120, 4294901760
    %2807 = vmatpush1.msra.mxu0 %v2806
    %2808 = vmatprep.subr.mxu0 0.0
    %2809 = vmatpush1.msra.mxu0 0.0
    %2810 = vmatprep.subr.mxu0 0.0
    %2811 = vmatpush1.msra.mxu0 0.0
    %2812 = vmatprep.subr.mxu0 0.0
    %2813 = vmatpush1.msra.mxu0 0.0
    %2814 = vmatprep.subr.mxu0 0.0
    %2815 = vmatpush1.msra.mxu0 0.0
    %2816 = vmatprep.subr.mxu0 0.0
    %2817 = vmatpush1.msra.mxu0 0.0
    %2818 = vmatprep.subr.mxu0 0.0
    %2819 = vmatpush1.msra.mxu0 0.0
    %2820 = vmatprep.subr.mxu0 0.0
    %2821 = vmatpush1.msra.mxu0 0.0
    %2822 = vmatprep.subr.mxu0 0.0
    %2823 = vmatpush1.msra.mxu0 0.0
    %2824 = vmatprep.subr.mxu0 0.0
    %2825 = vmatpush1.msra.mxu0 0.0
    %2826 = vmatprep.subr.mxu0 0.0
    %2827 = vmatpush1.msra.mxu0 0.0
    %2828 = vmatprep.subr.mxu0 0.0
    %2829 = vmatpush1.msra.mxu0 0.0
    %2830 = vmatprep.subr.mxu0 0.0
    %2831 = vmatpush1.msra.mxu0 0.0
    %2832 = vmatprep.subr.mxu0 0.0
    %2833 = vmatpush1.msra.mxu0 0.0
    %2834 = vmatprep.subr.mxu0 0.0
    %2835 = vmatpush1.msra.mxu0 0.0
    %2836 = vmatprep.subr.mxu0 0.0
    %2837 = vmatpush1.msra.mxu0 0.0
    %2838 = vmatprep.subr.mxu0 0.0
    %2839 = vmatpush1.msra.mxu0 0.0
    %2840 = vmatprep.subr.mxu0 0.0
    %2841 = vmatpush1.msra.mxu0 0.0
    %2842 = vmatprep.subr.mxu0 0.0
    %2843 = vmatpush1.msra.mxu0 0.0
    %2844 = vmatprep.subr.mxu0 0.0
    %2845 = vmatpush1.msra.mxu0 0.0
    %2846 = vmatprep.subr.mxu0 0.0
    %2847 = vmatpush1.msra.mxu0 0.0
    %2848 = vmatprep.subr.mxu0 0.0
    %2849 = vmatpush1.msra.mxu0 0.0
    %2850 = vmatprep.subr.mxu0 0.0
    %2851 = vmatpush1.msra.mxu0 0.0
    %2852 = vmatprep.subr.mxu0 0.0
    %2853 = vmatpush1.msra.mxu0 0.0
    %2854 = vmatprep.subr.mxu0 0.0
    %2855 = vmatpush1.msra.mxu0 0.0
    %2856 = vmatprep.subr.mxu0 0.0
    %2857 = vmatpush1.msra.mxu0 0.0
    %2858 = vmatprep.subr.mxu0 0.0
    %2859 = vmatpush1.msra.mxu0 0.0
    %2860 = vmatprep.subr.mxu0 0.0
    %2861 = vmatpush1.msra.mxu0 0.0
    %2862 = vmatprep.subr.mxu0 0.0
    %2863 = vmatpush1.msra.mxu0 0.0
    %2864 = vmatprep.subr.mxu0 0.0
    %2865 = vmatpush1.msra.mxu0 0.0
    %2866 = vmatprep.subr.mxu0 0.0
    %2867 = vmatpush1.msra.mxu0 0.0
    %2868 = vmatprep.mubr.f32.mxu0 0.0
    %v2869 = vand.u32 %v214, 4294901760
    %v2870 = vsub.f32 %v214, %v2869
    %v2871 = vand.u32 %v2870, 4294901760
    %v2872 = vsub.f32 %v2870, %v2871
    %v2873 = vand.u32 %v2872, 4294901760
    %2874 = vmatmul.mubr.f32.gmra.mrb[0].mxu0 %v2873
    %v2875 = vpop.f32.mrb[0].mxu0
    %v2876 = vadd.f32 %v2799, %v2875
    %v2877 = vpop.f32.mrb[0].mxu0
    %2878 = vdwg.mxu0
    %2879 = vmatprep.subr.mxu0 0.0
    %v2880 = vand.u32 %v119, 4294901760
    %v2881 = vsub.f32 %v119, %v2880
    %v2882 = vand.u32 %v2881, 4294901760
    %v2883 = vsub.f32 %v2881, %v2882
    %v2884 = vand.u32 %v2883, 4294901760
    %2885 = vmatpush1.msra.mxu0 %v2884
    %2886 = vmatprep.subr.mxu0 0.0
    %v2887 = vand.u32 %v120, 4294901760
    %v2888 = vsub.f32 %v120, %v2887
    %v2889 = vand.u32 %v2888, 4294901760
    %v2890 = vsub.f32 %v2888, %v2889
    %v2891 = vand.u32 %v2890, 4294901760
    %2892 = vmatpush1.msra.mxu0 %v2891
    %2893 = vmatprep.subr.mxu0 0.0
    %2894 = vmatpush1.msra.mxu0 0.0
    %2895 = vmatprep.subr.mxu0 0.0
    %2896 = vmatpush1.msra.mxu0 0.0
    %2897 = vmatprep.subr.mxu0 0.0
    %2898 = vmatpush1.msra.mxu0 0.0
    %2899 = vmatprep.subr.mxu0 0.0
    %2900 = vmatpush1.msra.mxu0 0.0
    %2901 = vmatprep.subr.mxu0 0.0
    %2902 = vmatpush1.msra.mxu0 0.0
    %2903 = vmatprep.subr.mxu0 0.0
    %2904 = vmatpush1.msra.mxu0 0.0
    %2905 = vmatprep.subr.mxu0 0.0
    %2906 = vmatpush1.msra.mxu0 0.0
    %2907 = vmatprep.subr.mxu0 0.0
    %2908 = vmatpush1.msra.mxu0 0.0
    %2909 = vmatprep.subr.mxu0 0.0
    %2910 = vmatpush1.msra.mxu0 0.0
    %2911 = vmatprep.subr.mxu0 0.0
    %2912 = vmatpush1.msra.mxu0 0.0
    %2913 = vmatprep.subr.mxu0 0.0
    %2914 = vmatpush1.msra.mxu0 0.0
    %2915 = vmatprep.subr.mxu0 0.0
    %2916 = vmatpush1.msra.mxu0 0.0
    %2917 = vmatprep.subr.mxu0 0.0
    %2918 = vmatpush1.msra.mxu0 0.0
    %2919 = vmatprep.subr.mxu0 0.0
    %2920 = vmatpush1.msra.mxu0 0.0
    %2921 = vmatprep.subr.mxu0 0.0
    %2922 = vmatpush1.msra.mxu0 0.0
    %2923 = vmatprep.subr.mxu0 0.0
    %2924 = vmatpush1.msra.mxu0 0.0
    %2925 = vmatprep.subr.mxu0 0.0
    %2926 = vmatpush1.msra.mxu0 0.0
    %2927 = vmatprep.subr.mxu0 0.0
    %2928 = vmatpush1.msra.mxu0 0.0
    %2929 = vmatprep.subr.mxu0 0.0
    %2930 = vmatpush1.msra.mxu0 0.0
    %2931 = vmatprep.subr.mxu0 0.0
    %2932 = vmatpush1.msra.mxu0 0.0
    %2933 = vmatprep.subr.mxu0 0.0
    %2934 = vmatpush1.msra.mxu0 0.0
    %2935 = vmatprep.subr.mxu0 0.0
    %2936 = vmatpush1.msra.mxu0 0.0
    %2937 = vmatprep.subr.mxu0 0.0
    %2938 = vmatpush1.msra.mxu0 0.0
    %2939 = vmatprep.subr.mxu0 0.0
    %2940 = vmatpush1.msra.mxu0 0.0
    %2941 = vmatprep.subr.mxu0 0.0
    %2942 = vmatpush1.msra.mxu0 0.0
    %2943 = vmatprep.subr.mxu0 0.0
    %2944 = vmatpush1.msra.mxu0 0.0
    %2945 = vmatprep.subr.mxu0 0.0
    %2946 = vmatpush1.msra.mxu0 0.0
    %2947 = vmatprep.subr.mxu0 0.0
    %2948 = vmatpush1.msra.mxu0 0.0
    %2949 = vmatprep.subr.mxu0 0.0
    %2950 = vmatpush1.msra.mxu0 0.0
    %2951 = vmatprep.subr.mxu0 0.0
    %2952 = vmatpush1.msra.mxu0 0.0
    %2953 = vmatprep.mubr.f32.mxu0 0.0
    %v2954 = vand.u32 %v214, 4294901760
    %2955 = vmatmul.mubr.f32.gmra.mrb[0].mxu0 %v2954
    %v2956 = vpop.f32.mrb[0].mxu0
    %v2957 = vadd.f32 %v2876, %v2956
    %v2958 = vpop.f32.mrb[0].mxu0
    %2959 = vdwg.mxu0
    %2960 = vmatprep.subr.mxu0 0.0
    %v2961 = vand.u32 %v119, 4294901760
    %v2962 = vsub.f32 %v119, %v2961
    %2963 = vmatpush1.msra.mxu0 %v2962
    %2964 = vmatprep.subr.mxu0 0.0
    %v2965 = vand.u32 %v120, 4294901760
    %v2966 = vsub.f32 %v120, %v2965
    %2967 = vmatpush1.msra.mxu0 %v2966
    %2968 = vmatprep.subr.mxu0 0.0
    %2969 = vmatpush1.msra.mxu0 0.0
    %2970 = vmatprep.subr.mxu0 0.0
    %2971 = vmatpush1.msra.mxu0 0.0
    %2972 = vmatprep.subr.mxu0 0.0
    %2973 = vmatpush1.msra.mxu0 0.0
    %2974 = vmatprep.subr.mxu0 0.0
    %2975 = vmatpush1.msra.mxu0 0.0
    %2976 = vmatprep.subr.mxu0 0.0
    %2977 = vmatpush1.msra.mxu0 0.0
    %2978 = vmatprep.subr.mxu0 0.0
    %2979 = vmatpush1.msra.mxu0 0.0
    %2980 = vmatprep.subr.mxu0 0.0
    %2981 = vmatpush1.msra.mxu0 0.0
    %2982 = vmatprep.subr.mxu0 0.0
    %2983 = vmatpush1.msra.mxu0 0.0
    %2984 = vmatprep.subr.mxu0 0.0
    %2985 = vmatpush1.msra.mxu0 0.0
    %2986 = vmatprep.subr.mxu0 0.0
    %2987 = vmatpush1.msra.mxu0 0.0
    %2988 = vmatprep.subr.mxu0 0.0
    %2989 = vmatpush1.msra.mxu0 0.0
    %2990 = vmatprep.subr.mxu0 0.0
    %2991 = vmatpush1.msra.mxu0 0.0
    %2992 = vmatprep.subr.mxu0 0.0
    %2993 = vmatpush1.msra.mxu0 0.0
    %2994 = vmatprep.subr.mxu0 0.0
    %2995 = vmatpush1.msra.mxu0 0.0
    %2996 = vmatprep.subr.mxu0 0.0
    %2997 = vmatpush1.msra.mxu0 0.0
    %2998 = vmatprep.subr.mxu0 0.0
    %2999 = vmatpush1.msra.mxu0 0.0
    %3000 = vmatprep.subr.mxu0 0.0
    %3001 = vmatpush1.msra.mxu0 0.0
    %3002 = vmatprep.subr.mxu0 0.0
    %3003 = vmatpush1.msra.mxu0 0.0
    %3004 = vmatprep.subr.mxu0 0.0
    %3005 = vmatpush1.msra.mxu0 0.0
    %3006 = vmatprep.subr.mxu0 0.0
    %3007 = vmatpush1.msra.mxu0 0.0
    %3008 = vmatprep.subr.mxu0 0.0
    %3009 = vmatpush1.msra.mxu0 0.0
    %3010 = vmatprep.subr.mxu0 0.0
    %3011 = vmatpush1.msra.mxu0 0.0
    %3012 = vmatprep.subr.mxu0 0.0
    %3013 = vmatpush1.msra.mxu0 0.0
    %3014 = vmatprep.subr.mxu0 0.0
    %3015 = vmatpush1.msra.mxu0 0.0
    %3016 = vmatprep.subr.mxu0 0.0
    %3017 = vmatpush1.msra.mxu0 0.0
    %3018 = vmatprep.subr.mxu0 0.0
    %3019 = vmatpush1.msra.mxu0 0.0
    %3020 = vmatprep.subr.mxu0 0.0
    %3021 = vmatpush1.msra.mxu0 0.0
    %3022 = vmatprep.subr.mxu0 0.0
    %3023 = vmatpush1.msra.mxu0 0.0
    %3024 = vmatprep.subr.mxu0 0.0
    %3025 = vmatpush1.msra.mxu0 0.0
    %3026 = vmatprep.subr.mxu0 0.0
    %3027 = vmatpush1.msra.mxu0 0.0
    %3028 = vmatprep.mubr.f32.mxu0 0.0
    %v3029 = vand.u32 %v214, 4294901760
    %v3030 = vsub.f32 %v214, %v3029
    %3031 = vmatmul.mubr.f32.gmra.mrb[0].mxu0 %v3030
    %v3032 = vpop.f32.mrb[0].mxu0
    %v3033 = vadd.f32 %v2957, %v3032
    %v3034 = vpop.f32.mrb[0].mxu0
    %3035 = vdwg.mxu0
    %3036 = vmatprep.subr.mxu0 0.0
    %v3037 = vand.u32 %v119, 4294901760
    %3038 = vmatpush1.msra.mxu0 %v3037
    %3039 = vmatprep.subr.mxu0 0.0
    %v3040 = vand.u32 %v120, 4294901760
    %3041 = vmatpush1.msra.mxu0 %v3040
    %3042 = vmatprep.subr.mxu0 0.0
    %3043 = vmatpush1.msra.mxu0 0.0
    %3044 = vmatprep.subr.mxu0 0.0
    %3045 = vmatpush1.msra.mxu0 0.0
    %3046 = vmatprep.subr.mxu0 0.0
    %3047 = vmatpush1.msra.mxu0 0.0
    %3048 = vmatprep.subr.mxu0 0.0
    %3049 = vmatpush1.msra.mxu0 0.0
    %3050 = vmatprep.subr.mxu0 0.0
    %3051 = vmatpush1.msra.mxu0 0.0
    %3052 = vmatprep.subr.mxu0 0.0
    %3053 = vmatpush1.msra.mxu0 0.0
    %3054 = vmatprep.subr.mxu0 0.0
    %3055 = vmatpush1.msra.mxu0 0.0
    %3056 = vmatprep.subr.mxu0 0.0
    %3057 = vmatpush1.msra.mxu0 0.0
    %3058 = vmatprep.subr.mxu0 0.0
    %3059 = vmatpush1.msra.mxu0 0.0
    %3060 = vmatprep.subr.mxu0 0.0
    %3061 = vmatpush1.msra.mxu0 0.0
    %3062 = vmatprep.subr.mxu0 0.0
    %3063 = vmatpush1.msra.mxu0 0.0
    %3064 = vmatprep.subr.mxu0 0.0
    %3065 = vmatpush1.msra.mxu0 0.0
    %3066 = vmatprep.subr.mxu0 0.0
    %3067 = vmatpush1.msra.mxu0 0.0
    %3068 = vmatprep.subr.mxu0 0.0
    %3069 = vmatpush1.msra.mxu0 0.0
    %3070 = vmatprep.subr.mxu0 0.0
    %3071 = vmatpush1.msra.mxu0 0.0
    %3072 = vmatprep.subr.mxu0 0.0
    %3073 = vmatpush1.msra.mxu0 0.0
    %3074 = vmatprep.subr.mxu0 0.0
    %3075 = vmatpush1.msra.mxu0 0.0
    %3076 = vmatprep.subr.mxu0 0.0
    %3077 = vmatpush1.msra.mxu0 0.0
    %3078 = vmatprep.subr.mxu0 0.0
    %3079 = vmatpush1.msra.mxu0 0.0
    %3080 = vmatprep.subr.mxu0 0.0
    %3081 = vmatpush1.msra.mxu0 0.0
    %3082 = vmatprep.subr.mxu0 0.0
    %3083 = vmatpush1.msra.mxu0 0.0
    %3084 = vmatprep.subr.mxu0 0.0
    %3085 = vmatpush1.msra.mxu0 0.0
    %3086 = vmatprep.subr.mxu0 0.0
    %3087 = vmatpush1.msra.mxu0 0.0
    %3088 = vmatprep.subr.mxu0 0.0
    %3089 = vmatpush1.msra.mxu0 0.0
    %3090 = vmatprep.subr.mxu0 0.0
    %3091 = vmatpush1.msra.mxu0 0.0
    %3092 = vmatprep.subr.mxu0 0.0
    %3093 = vmatpush1.msra.mxu0 0.0
    %3094 = vmatprep.subr.mxu0 0.0
    %3095 = vmatpush1.msra.mxu0 0.0
    %3096 = vmatprep.subr.mxu0 0.0
    %3097 = vmatpush1.msra.mxu0 0.0
    %3098 = vmatprep.subr.mxu0 0.0
    %3099 = vmatpush1.msra.mxu0 0.0
    %3100 = vmatprep.subr.mxu0 0.0
    %3101 = vmatpush1.msra.mxu0 0.0
    %3102 = vmatprep.mubr.f32.mxu0 0.0
    %v3103 = vand.u32 %v214, 4294901760
    %v3104 = vsub.f32 %v214, %v3103
    %v3105 = vand.u32 %v3104, 4294901760
    %3106 = vmatmul.mubr.f32.gmra.mrb[0].mxu0 %v3105
    %v3107 = vpop.f32.mrb[0].mxu0
    %v3108 = vadd.f32 %v3033, %v3107
    %v3109 = vpop.f32.mrb[0].mxu0
    %3110 = vdwg.mxu0
    %3111 = vmatprep.subr.mxu0 0.0
    %v3112 = vand.u32 %v119, 4294901760
    %v3113 = vsub.f32 %v119, %v3112
    %v3114 = vand.u32 %v3113, 4294901760
    %3115 = vmatpush1.msra.mxu0 %v3114
    %3116 = vmatprep.subr.mxu0 0.0
    %v3117 = vand.u32 %v120, 4294901760
    %v3118 = vsub.f32 %v120, %v3117
    %v3119 = vand.u32 %v3118, 4294901760
    %3120 = vmatpush1.msra.mxu0 %v3119
    %3121 = vmatprep.subr.mxu0 0.0
    %3122 = vmatpush1.msra.mxu0 0.0
    %3123 = vmatprep.subr.mxu0 0.0
    %3124 = vmatpush1.msra.mxu0 0.0
    %3125 = vmatprep.subr.mxu0 0.0
    %3126 = vmatpush1.msra.mxu0 0.0
    %3127 = vmatprep.subr.mxu0 0.0
    %3128 = vmatpush1.msra.mxu0 0.0
    %3129 = vmatprep.subr.mxu0 0.0
    %3130 = vmatpush1.msra.mxu0 0.0
    %3131 = vmatprep.subr.mxu0 0.0
    %3132 = vmatpush1.msra.mxu0 0.0
    %3133 = vmatprep.subr.mxu0 0.0
    %3134 = vmatpush1.msra.mxu0 0.0
    %3135 = vmatprep.subr.mxu0 0.0
    %3136 = vmatpush1.msra.mxu0 0.0
    %3137 = vmatprep.subr.mxu0 0.0
    %3138 = vmatpush1.msra.mxu0 0.0
    %3139 = vmatprep.subr.mxu0 0.0
    %3140 = vmatpush1.msra.mxu0 0.0
    %3141 = vmatprep.subr.mxu0 0.0
    %3142 = vmatpush1.msra.mxu0 0.0
    %3143 = vmatprep.subr.mxu0 0.0
    %3144 = vmatpush1.msra.mxu0 0.0
    %3145 = vmatprep.subr.mxu0 0.0
    %3146 = vmatpush1.msra.mxu0 0.0
    %3147 = vmatprep.subr.mxu0 0.0
    %3148 = vmatpush1.msra.mxu0 0.0
    %3149 = vmatprep.subr.mxu0 0.0
    %3150 = vmatpush1.msra.mxu0 0.0
    %3151 = vmatprep.subr.mxu0 0.0
    %3152 = vmatpush1.msra.mxu0 0.0
    %3153 = vmatprep.subr.mxu0 0.0
    %3154 = vmatpush1.msra.mxu0 0.0
    %3155 = vmatprep.subr.mxu0 0.0
    %3156 = vmatpush1.msra.mxu0 0.0
    %3157 = vmatprep.subr.mxu0 0.0
    %3158 = vmatpush1.msra.mxu0 0.0
    %3159 = vmatprep.subr.mxu0 0.0
    %3160 = vmatpush1.msra.mxu0 0.0
    %3161 = vmatprep.subr.mxu0 0.0
    %3162 = vmatpush1.msra.mxu0 0.0
    %3163 = vmatprep.subr.mxu0 0.0
    %3164 = vmatpush1.msra.mxu0 0.0
    %3165 = vmatprep.subr.mxu0 0.0
    %3166 = vmatpush1.msra.mxu0 0.0
    %3167 = vmatprep.subr.mxu0 0.0
    %3168 = vmatpush1.msra.mxu0 0.0
    %3169 = vmatprep.subr.mxu0 0.0
    %3170 = vmatpush1.msra.mxu0 0.0
    %3171 = vmatprep.subr.mxu0 0.0
    %3172 = vmatpush1.msra.mxu0 0.0
    %3173 = vmatprep.subr.mxu0 0.0
    %3174 = vmatpush1.msra.mxu0 0.0
    %3175 = vmatprep.subr.mxu0 0.0
    %3176 = vmatpush1.msra.mxu0 0.0
    %3177 = vmatprep.subr.mxu0 0.0
    %3178 = vmatpush1.msra.mxu0 0.0
    %3179 = vmatprep.subr.mxu0 0.0
    %3180 = vmatpush1.msra.mxu0 0.0
    %3181 = vmatprep.mubr.f32.mxu0 0.0
    %v3182 = vand.u32 %v214, 4294901760
    %3183 = vmatmul.mubr.f32.gmra.mrb[0].mxu0 %v3182
    %v3184 = vpop.f32.mrb[0].mxu0
    %v3185 = vadd.f32 %v3108, %v3184
    %v3186 = vpop.f32.mrb[0].mxu0
    %3187 = vdwg.mxu0
    %3188 = vmatprep.subr.mxu0 0.0
    %v3189 = vand.u32 %v119, 4294901760
    %3190 = vmatpush1.msra.mxu0 %v3189
    %3191 = vmatprep.subr.mxu0 0.0
    %v3192 = vand.u32 %v120, 4294901760
    %3193 = vmatpush1.msra.mxu0 %v3192
    %3194 = vmatprep.subr.mxu0 0.0
    %3195 = vmatpush1.msra.mxu0 0.0
    %3196 = vmatprep.subr.mxu0 0.0
    %3197 = vmatpush1.msra.mxu0 0.0
    %3198 = vmatprep.subr.mxu0 0.0
    %3199 = vmatpush1.msra.mxu0 0.0
    %3200 = vmatprep.subr.mxu0 0.0
    %3201 = vmatpush1.msra.mxu0 0.0
    %3202 = vmatprep.subr.mxu0 0.0
    %3203 = vmatpush1.msra.mxu0 0.0
    %3204 = vmatprep.subr.mxu0 0.0
    %3205 = vmatpush1.msra.mxu0 0.0
    %3206 = vmatprep.subr.mxu0 0.0
    %3207 = vmatpush1.msra.mxu0 0.0
    %3208 = vmatprep.subr.mxu0 0.0
    %3209 = vmatpush1.msra.mxu0 0.0
    %3210 = vmatprep.subr.mxu0 0.0
    %3211 = vmatpush1.msra.mxu0 0.0
    %3212 = vmatprep.subr.mxu0 0.0
    %3213 = vmatpush1.msra.mxu0 0.0
    %3214 = vmatprep.subr.mxu0 0.0
    %3215 = vmatpush1.msra.mxu0 0.0
    %3216 = vmatprep.subr.mxu0 0.0
    %3217 = vmatpush1.msra.mxu0 0.0
    %3218 = vmatprep.subr.mxu0 0.0
    %3219 = vmatpush1.msra.mxu0 0.0
    %3220 = vmatprep.subr.mxu0 0.0
    %3221 = vmatpush1.msra.mxu0 0.0
    %3222 = vmatprep.subr.mxu0 0.0
    %3223 = vmatpush1.msra.mxu0 0.0
    %3224 = vmatprep.subr.mxu0 0.0
    %3225 = vmatpush1.msra.mxu0 0.0
    %3226 = vmatprep.subr.mxu0 0.0
    %3227 = vmatpush1.msra.mxu0 0.0
    %3228 = vmatprep.subr.mxu0 0.0
    %3229 = vmatpush1.msra.mxu0 0.0
    %3230 = vmatprep.subr.mxu0 0.0
    %3231 = vmatpush1.msra.mxu0 0.0
    %3232 = vmatprep.subr.mxu0 0.0
    %3233 = vmatpush1.msra.mxu0 0.0
    %3234 = vmatprep.subr.mxu0 0.0
    %3235 = vmatpush1.msra.mxu0 0.0
    %3236 = vmatprep.subr.mxu0 0.0
    %3237 = vmatpush1.msra.mxu0 0.0
    %3238 = vmatprep.subr.mxu0 0.0
    %3239 = vmatpush1.msra.mxu0 0.0
    %3240 = vmatprep.subr.mxu0 0.0
    %3241 = vmatpush1.msra.mxu0 0.0
    %3242 = vmatprep.subr.mxu0 0.0
    %3243 = vmatpush1.msra.mxu0 0.0
    %3244 = vmatprep.subr.mxu0 0.0
    %3245 = vmatpush1.msra.mxu0 0.0
    %3246 = vmatprep.subr.mxu0 0.0
    %3247 = vmatpush1.msra.mxu0 0.0
    %3248 = vmatprep.subr.mxu0 0.0
    %3249 = vmatpush1.msra.mxu0 0.0
    %3250 = vmatprep.subr.mxu0 0.0
    %3251 = vmatpush1.msra.mxu0 0.0
    %3252 = vmatprep.subr.mxu0 0.0
    %3253 = vmatpush1.msra.mxu0 0.0
    %3254 = vmatprep.mubr.f32.mxu0 0.0
    %v3255 = vand.u32 %v214, 4294901760
    %3256 = vmatmul.mubr.f32.gmra.mrb[0].mxu0 %v3255
    %v3257 = vpop.f32.mrb[0].mxu0
    %v3258 = vadd.f32 %v3185, %v3257
    %v3259 = vpop.f32.mrb[0].mxu0
    %3260 = vdwg.mxu0
    %vm3261 = vcmask 80896
    %3262 = vst.msk [vmem:[#allocation2] sm:$0xff] %vm3261, %v3258
    // Predicated region
    $region14: #{tpu_custom_call.1} parent=1 // pred_check
      _
    $region15: #{tpu_custom_call.1} parent=1 // pred_check_branch
      %3264 = sbr.rel (0) target = $region17
    $region16: #{tpu_custom_call.1} parent=1 // pred_region
      %s3266 = ssub.s32 128, 32
      %3267 = vsyncadd [#allocation3], %s3266
      %s3268 = sshll.u32 [#allocation2], 4
      %s3269 = int_to_ptr.vmem [resolvable:$true] %s3268
      %3274 = dma.vmem_to_hbm [thread:$0]  %s3269, 32, %s3, [#allocation3], 32, 32, 2
    $region17: #{tpu_custom_call.1} parent=1 // pred_fallthru
      _
    // Predicated region
    $region18: #{tpu_custom_call.1} parent=1 // pred_check
      _
    $region19: #{tpu_custom_call.1} parent=1 // pred_check_branch
      %3276 = sbr.rel (0) target = $region21
    $region20: #{tpu_custom_call.1} parent=1 // pred_region
      %3277 = dma.done [#allocation3], 128
    $region21: #{tpu_custom_call.1} parent=1 // pred_fallthru
      _
    %3278 = vsyncpa [#allocation3], 1

</llo_original>
